<compile_context>
chip_gen: v7x
topology: tpu7x:2x2x1
jax: 0.10.0
libtpu: 0.0.40
codegen_flags: <defaults>
</compile_context>

<pallas_src>
import functools

import jax
import jax.numpy as jnp
from jax.experimental import pallas as pl
from jax.experimental.pallas import tpu as pltpu

EMBED_DIM = 8
PATCH = 4
IMG = 28
GRID_HW = IMG // PATCH                     # 7
N_PATCHES = GRID_HW * GRID_HW              # 49
N_TOK = N_PATCHES + 1                      # 50 (CLS + patches)
SEQ_PAD = 64                               # tokens per sample, padded 50 -> 64
LANE = 2 * SEQ_PAD                         # 128: two samples packed per lane row
PATCH_FEAT = PATCH * PATCH                 # 16 (in_channels = 1)
N_LAYERS = 8
N_CLASSES = 10
CLS_PAD = 16                               # classifier rows padded 10 -> 16
MLP_DIM = EMBED_DIM * 4                    # 32
LN_EPS = 1e-5                              # torch.nn.LayerNorm default
NEG_BIG = -1e30


def _round_up(x, m):
    return ((x + m - 1) // m) * m


# ---------------------------------------------------------------------------
# Kernel helpers
# ---------------------------------------------------------------------------
def _layernorm_feat(x, g, b):
    """LayerNorm over the feature (sublane) axis.  x: (G, D, LANE)."""
    mu = jnp.mean(x, axis=1, keepdims=True)
    d = x - mu
    var = jnp.mean(d * d, axis=1, keepdims=True)
    return d * jax.lax.rsqrt(var + LN_EPS) * g + b


# ---------------------------------------------------------------------------
# Kernel
# ---------------------------------------------------------------------------
def vit_kernel(patches_ref, pw_ref, add_ref, mask_ref,
               ln1g_ref, ln1b_ref,
               wqkv_ref, bqkv_ref,
               ln2g_ref, ln2b_ref,
               w1_ref, b1_ref, w2_ref, b2_ref,
               cw_ref, cb_ref,
               out_ref,
               *, n_layers):
    g = patches_ref.shape[0]
    d = EMBED_DIM

    # Patch embedding: (G, 8, 16) x (G, 16, 128) -> (G, 8, 128), lane-dense.
    pw = jnp.broadcast_to(pw_ref[...][None], (g,) + pw_ref.shape)
    x = jnp.einsum("gef,gft->get", pw, patches_ref[...],
                   preferred_element_type=jnp.float32)
    x = x + add_ref[...][None]                          # cls/conv-bias + pos

    # Static additive attention mask: key padding + cross-sample blocking.
    mask = mask_ref[...][None]                          # (1, 128, 128)

    def layer(l, x):
        # --- self-attention sub-block ------------------------------------
        h = _layernorm_feat(x, ln1g_ref[l][None], ln1b_ref[l][None])
        wqkv = jnp.broadcast_to(wqkv_ref[l][None], (g, 3 * d, d))
        qkv = jnp.einsum("ged,gdt->get", wqkv, h,
                         preferred_element_type=jnp.float32) + bqkv_ref[l][None]
        q = qkv[:, 0 * d:1 * d]                         # (G, 8, 128), scale folded in
        k = qkv[:, 1 * d:2 * d]
        v = qkv[:, 2 * d:3 * d]

        qT = jnp.swapaxes(q, 1, 2)                      # (G, 128, 8)
        s = jnp.einsum("gqd,gdk->gqk", qT, k,
                       preferred_element_type=jnp.float32) + mask
        m = jnp.max(s, axis=-1, keepdims=True)
        e = jnp.exp(s - m)
        attn = e / jnp.sum(e, axis=-1, keepdims=True)   # exact normalisation
        ctx = jnp.einsum("gek,gqk->geq", v, attn,
                         preferred_element_type=jnp.float32)   # (G, 8, 128)
        x = x + ctx

        # --- MLP sub-block -------------------------------------------------
        h2 = _layernorm_feat(x, ln2g_ref[l][None], ln2b_ref[l][None])
        w1 = jnp.broadcast_to(w1_ref[l][None], (g, MLP_DIM, d))
        hm = jnp.einsum("gmd,gdt->gmt", w1, h2,
                        preferred_element_type=jnp.float32) + b1_ref[l][None]
        hm = jnp.maximum(hm, 0.0)
        w2 = jnp.broadcast_to(w2_ref[l][None], (g, d, MLP_DIM))
        mlp = jnp.einsum("gem,gmt->get", w2, hm,
                         preferred_element_type=jnp.float32) + b2_ref[l][None]
        return x + mlp

    x = jax.lax.fori_loop(0, n_layers, layer, x)

    # Classifier over all token lanes (lane-dense output slab); the host
    # extracts the CLS columns (lane 0 and lane 64) and slices 10 classes.
    cw = jnp.broadcast_to(cw_ref[...][None], (g,) + cw_ref.shape)
    out_ref[...] = (jnp.einsum("gcd,gdt->gct", cw, x,
                               preferred_element_type=jnp.float32)
                    + cb_ref[...][None])


# ---------------------------------------------------------------------------
# Host-side glue
# ---------------------------------------------------------------------------
def extract_patches(x):
    """x: (B, 1, 28, 28) NCHW -> (B, 49, 16) flattened non-overlapping patches."""
    b = x.shape[0]
    p = x[:, 0].reshape(b, GRID_HW, PATCH, GRID_HW, PATCH)
    p = p.transpose(0, 1, 3, 2, 4).reshape(b, N_PATCHES, PATCH_FEAT)
    return p


def _rep_spec(shape):
    zeros = (0,) * len(shape)
    return pl.BlockSpec(shape, lambda i, _z=zeros: _z)


def vit_forward(x, p, g_tile=None):
    bsz = x.shape[0]
    n_pairs = pl.cdiv(bsz, 2)
    if g_tile is None:
        # Cap the tile so the per-tile working set stays comfortably inside
        # scoped VMEM on every generation, and aim for >= 2 grid steps so the
        # "parallel" batch axis can split across v7x's two TensorCores.
        g_tile = min(16, max(1, pl.cdiv(n_pairs, 2)))
    g_pad = _round_up(n_pairs, g_tile)
    b_pad = 2 * g_pad

    # --- activations: feature-major, two samples packed along the 128 lanes.
    patches = extract_patches(x)                                    # (B, 49, 16)
    tokf = jnp.zeros((b_pad, SEQ_PAD, PATCH_FEAT), jnp.float32)
    tokf = tokf.at[:bsz, 1:N_TOK].set(patches)                      # row 0 = CLS slot
    tokf = jnp.swapaxes(tokf, 1, 2)                                 # (b_pad, 16, 64)
    patches_t = (tokf.reshape(g_pad, 2, PATCH_FEAT, SEQ_PAD)
                     .transpose(0, 2, 1, 3)
                     .reshape(g_pad, PATCH_FEAT, LANE))             # (G, 16, 128)

    # Additive term per token (cls + pos / conv-bias + pos), lane layout.
    add = jnp.zeros((SEQ_PAD, EMBED_DIM), jnp.float32)
    add = add.at[0].set(p["cls"][0] + p["pos"][0, 0])
    add = add.at[1:N_TOK].set(p["pb"][None, :] + p["pos"][0, 1:N_TOK])
    add_t = jnp.tile(add.T, (1, 2))                                 # (8, 128)

    # Attention mask: -1e30 on padded keys and on cross-sample blocks.
    tok_id = jnp.arange(LANE)
    same_sample = (tok_id[:, None] // SEQ_PAD) == (tok_id[None, :] // SEQ_PAD)
    key_valid = (tok_id % SEQ_PAD) < N_TOK
    mask_t = jnp.where(same_sample & key_valid[None, :], 0.0, NEG_BIG)
    mask_t = mask_t.astype(jnp.float32)                             # (128, 128)

    # Weights in (out, in) orientation; 1/sqrt(d) folded into the Q projection.
    scale = EMBED_DIM ** -0.5
    wqkv_t = jnp.concatenate([jnp.swapaxes(p["wq"], 1, 2) * scale,
                              jnp.swapaxes(p["wk"], 1, 2),
                              jnp.swapaxes(p["wv"], 1, 2)], axis=1)  # (L, 24, 8)
    bqkv = jnp.concatenate([p["bq"] * scale, p["bk"], p["bv"]], axis=-1)
    bqkv_t = jnp.broadcast_to(bqkv[:, :, None], (N_LAYERS, 3 * EMBED_DIM, LANE))

    w1_t = jnp.swapaxes(p["w1"], 1, 2)                               # (L, 32, 8)
    b1_t = jnp.broadcast_to(p["b1"][:, :, None], (N_LAYERS, MLP_DIM, LANE))
    w2_t = jnp.swapaxes(p["w2"], 1, 2)                               # (L, 8, 32)
    b2_t = jnp.broadcast_to(p["b2"][:, :, None], (N_LAYERS, EMBED_DIM, LANE))

    ln1g_t = jnp.broadcast_to(p["ln1g"][:, :, None], (N_LAYERS, EMBED_DIM, LANE))
    ln1b_t = jnp.broadcast_to(p["ln1b"][:, :, None], (N_LAYERS, EMBED_DIM, LANE))
    ln2g_t = jnp.broadcast_to(p["ln2g"][:, :, None], (N_LAYERS, EMBED_DIM, LANE))
    ln2b_t = jnp.broadcast_to(p["ln2b"][:, :, None], (N_LAYERS, EMBED_DIM, LANE))

    pw_t = p["pw"].T                                                 # (8, 16)
    cw_t = jnp.zeros((CLS_PAD, EMBED_DIM), jnp.float32).at[:N_CLASSES].set(p["cw"].T)
    cb_t = jnp.zeros((CLS_PAD, LANE), jnp.float32).at[:N_CLASSES].set(
        jnp.broadcast_to(p["cb"][:, None], (N_CLASSES, LANE)))

    inputs = (patches_t, pw_t, add_t, mask_t,
              ln1g_t, ln1b_t, wqkv_t, bqkv_t,
              ln2g_t, ln2b_t, w1_t, b1_t, w2_t, b2_t,
              cw_t, cb_t)

    in_specs = [pl.BlockSpec((g_tile, PATCH_FEAT, LANE), lambda i: (i, 0, 0))]
    in_specs += [_rep_spec(a.shape) for a in inputs[1:]]

    kernel = functools.partial(vit_kernel, n_layers=N_LAYERS)
    out = pl.pallas_call(
        kernel,
        out_shape=jax.ShapeDtypeStruct((g_pad, CLS_PAD, LANE), jnp.float32),
        grid=(g_pad // g_tile,),
        in_specs=in_specs,
        out_specs=pl.BlockSpec((g_tile, CLS_PAD, LANE), lambda i: (i, 0, 0)),
        compiler_params=pltpu.CompilerParams(
            dimension_semantics=("parallel",),
            vmem_limit_bytes=32 * 1024 * 1024),
    )(*inputs)                                                       # (G, 16, 128)

    # CLS token of sample 2g lives at lane 0, of sample 2g+1 at lane 64.
    logits = jnp.stack([out[:, :, 0], out[:, :, SEQ_PAD]], axis=1)   # (G, 2, 16)
    return logits.reshape(b_pad, CLS_PAD)[:bsz, :N_CLASSES]


# ---------------------------------------------------------------------------
# Pure-JAX reference (mirrors the PyTorch module semantics)
# ---------------------------------------------------------------------------
def _layernorm_ref(x, g, b):
    mu = jnp.mean(x, axis=-1, keepdims=True)
    var = jnp.mean((x - mu) ** 2, axis=-1, keepdims=True)
    return (x - mu) * jax.lax.rsqrt(var + LN_EPS) * g + b


def reference_forward(x, p):
    bsz = x.shape[0]
    patches = extract_patches(x)                                     # (B, 49, 16)
    proj = jnp.einsum("btk,kd->btd", patches, p["pw"]) + p["pb"]
    cls = jnp.broadcast_to(p["cls"], (bsz, 1, EMBED_DIM))
    tok = jnp.concatenate([cls, proj], axis=1) + p["pos"]            # (B, 50, D)
    scale = EMBED_DIM ** -0.5
    for l in range(N_LAYERS):
        h = _layernorm_ref(tok, p["ln1g"][l], p["ln1b"][l])
        q = h @ p["wq"][l] + p["bq"][l]
        k = h @ p["wk"][l] + p["bk"][l]
        v = h @ p["wv"][l] + p["bv"][l]
        scores = jnp.einsum("bqd,bkd->bqk", q, k) * scale
        attn = jax.nn.softmax(scores, axis=-1)
        tok = tok + jnp.einsum("bqk,bkd->bqd", attn, v)
        h2 = _layernorm_ref(tok, p["ln2g"][l], p["ln2b"][l])
        m = jnp.maximum(h2 @ p["w1"][l] + p["b1"][l], 0.0)
        tok = tok + (m @ p["w2"][l] + p["b2"][l])
    return tok[:, 0] @ p["cw"] + p["cb"]


# ---------------------------------------------------------------------------
# Deterministic parameter init
# ---------------------------------------------------------------------------
def init_params(key):
    ks = jax.random.split(key, 16)

    def rnd(k, shape, scale=0.05):
        return scale * jax.random.normal(k, shape, jnp.float32)

    conv_w = rnd(ks[0], (EMBED_DIM, 1, PATCH, PATCH))                # NCHW conv weight
    return {
        "pw": conv_w.reshape(EMBED_DIM, PATCH_FEAT).T,               # (16, 8)
        "pb": rnd(ks[1], (EMBED_DIM,)),
        "cls": rnd(ks[2], (1, EMBED_DIM), scale=1.0),                # torch.randn(1,1,D)
        "pos": rnd(ks[3], (1, N_TOK, EMBED_DIM), scale=1.0),         # torch.randn(1,50,D)
        "ln1g": jnp.ones((N_LAYERS, EMBED_DIM), jnp.float32),
        "ln1b": jnp.zeros((N_LAYERS, EMBED_DIM), jnp.float32),
        "ln2g": jnp.ones((N_LAYERS, EMBED_DIM), jnp.float32),
        "ln2b": jnp.zeros((N_LAYERS, EMBED_DIM), jnp.float32),
        "wq": rnd(ks[4], (N_LAYERS, EMBED_DIM, EMBED_DIM)),
        "bq": rnd(ks[5], (N_LAYERS, EMBED_DIM)),
        "wk": rnd(ks[6], (N_LAYERS, EMBED_DIM, EMBED_DIM)),
        "bk": rnd(ks[7], (N_LAYERS, EMBED_DIM)),
        "wv": rnd(ks[8], (N_LAYERS, EMBED_DIM, EMBED_DIM)),
        "bv": rnd(ks[9], (N_LAYERS, EMBED_DIM)),
        "w1": rnd(ks[10], (N_LAYERS, EMBED_DIM, MLP_DIM)),
        "b1": rnd(ks[11], (N_LAYERS, MLP_DIM)),
        "w2": rnd(ks[12], (N_LAYERS, MLP_DIM, EMBED_DIM)),
        "b2": rnd(ks[13], (N_LAYERS, EMBED_DIM)),
        "cw": rnd(ks[14], (EMBED_DIM, N_CLASSES)),
        "cb": rnd(ks[15], (N_CLASSES,)),
    }


if __name__ == "__main__":
    master = jax.random.PRNGKey(0)
    k_params, k_x = jax.random.split(master)
    params = init_params(k_params)

    # NCHW, 1 input channel, 28x28 (the module's positional embedding fixes
    # 28x28).  batch=6 exercises sample-pair packing, batch padding and a
    # multi-step grid.
    x = jax.random.normal(k_x, (6, 1, IMG, IMG), jnp.float32)

    out = jax.block_until_ready(vit_forward(x, params))
    ref = reference_forward(x, params)

    # Tolerance accounts for the TPU MXU's default bf16-pass f32 matmuls on
    # both the kernel and the reference side.
    if not jnp.allclose(out, ref, atol=5e-3, rtol=5e-3):
        diff = float(jnp.max(jnp.abs(out - ref)))
        raise AssertionError(
            f"Pallas output mismatch vs reference (max abs diff {diff}):\n{out}\n{ref}")

    print("KERNEL_OK")
</pallas_src>

<mosaic_0001>
module attributes {stable_mosaic.version = 11 : i64} {
  func.func @vit_kernel(%arg0: i32, %arg1: memref<2x16x128xf32, #tpu.memory_space<vmem>>, %arg2: memref<8x16xf32, #tpu.memory_space<vmem>>, %arg3: memref<8x128xf32, #tpu.memory_space<vmem>>, %arg4: memref<128x128xf32, #tpu.memory_space<vmem>>, %arg5: memref<8x8x128xf32, #tpu.memory_space<vmem>>, %arg6: memref<8x8x128xf32, #tpu.memory_space<vmem>>, %arg7: memref<8x24x8xf32, #tpu.memory_space<vmem>>, %arg8: memref<8x24x128xf32, #tpu.memory_space<vmem>>, %arg9: memref<8x8x128xf32, #tpu.memory_space<vmem>>, %arg10: memref<8x8x128xf32, #tpu.memory_space<vmem>>, %arg11: memref<8x32x8xf32, #tpu.memory_space<vmem>>, %arg12: memref<8x32x128xf32, #tpu.memory_space<vmem>>, %arg13: memref<8x8x32xf32, #tpu.memory_space<vmem>>, %arg14: memref<8x8x128xf32, #tpu.memory_space<vmem>>, %arg15: memref<16x8xf32, #tpu.memory_space<vmem>>, %arg16: memref<16x128xf32, #tpu.memory_space<vmem>>, %arg17: memref<2x16x128xf32, #tpu.memory_space<vmem>>) attributes {dimension_semantics = [#tpu.dimension_semantics<parallel>], iteration_bounds = array<i64: 2>, scalar_prefetch = 0 : i64, scratch_operands = 0 : i64, tpu.core_type = #tpu.core_type<tc>, window_params = [{transform_indices = @transform_0, window_bounds = array<i64: 2, 16, 128>}, {pipeline_mode = #tpu.pipeline_mode<synchronous>, transform_indices = @transform_1, window_bounds = array<i64: 8, 16>}, {pipeline_mode = #tpu.pipeline_mode<synchronous>, transform_indices = @transform_2, window_bounds = array<i64: 8, 128>}, {pipeline_mode = #tpu.pipeline_mode<synchronous>, transform_indices = @transform_3, window_bounds = array<i64: 128, 128>}, {pipeline_mode = #tpu.pipeline_mode<synchronous>, transform_indices = @transform_4, window_bounds = array<i64: 8, 8, 128>}, {pipeline_mode = #tpu.pipeline_mode<synchronous>, transform_indices = @transform_5, window_bounds = array<i64: 8, 8, 128>}, {pipeline_mode = #tpu.pipeline_mode<synchronous>, transform_indices = @transform_6, window_bounds = array<i64: 8, 24, 8>}, {pipeline_mode = #tpu.pipeline_mode<synchronous>, transform_indices = @transform_7, window_bounds = array<i64: 8, 24, 128>}, {pipeline_mode = #tpu.pipeline_mode<synchronous>, transform_indices = @transform_8, window_bounds = array<i64: 8, 8, 128>}, {pipeline_mode = #tpu.pipeline_mode<synchronous>, transform_indices = @transform_9, window_bounds = array<i64: 8, 8, 128>}, {pipeline_mode = #tpu.pipeline_mode<synchronous>, transform_indices = @transform_10, window_bounds = array<i64: 8, 32, 8>}, {pipeline_mode = #tpu.pipeline_mode<synchronous>, transform_indices = @transform_11, window_bounds = array<i64: 8, 32, 128>}, {pipeline_mode = #tpu.pipeline_mode<synchronous>, transform_indices = @transform_12, window_bounds = array<i64: 8, 8, 32>}, {pipeline_mode = #tpu.pipeline_mode<synchronous>, transform_indices = @transform_13, window_bounds = array<i64: 8, 8, 128>}, {pipeline_mode = #tpu.pipeline_mode<synchronous>, transform_indices = @transform_14, window_bounds = array<i64: 16, 8>}, {pipeline_mode = #tpu.pipeline_mode<synchronous>, transform_indices = @transform_15, window_bounds = array<i64: 16, 128>}, {transform_indices = @transform_16, window_bounds = array<i64: 2, 16, 128>}]} {
    %c0 = arith.constant 0 : index
    %c0_0 = arith.constant 0 : index
    %0 = vector.load %arg2[%c0, %c0_0] : memref<8x16xf32, #tpu.memory_space<vmem>>, vector<8x16xf32>
    %1 = vector.shape_cast %0 : vector<8x16xf32> to vector<1x8x16xf32>
    %2 = vector.shape_cast %1 : vector<1x8x16xf32> to vector<1x8x16xf32>
    %3 = vector.broadcast %2 : vector<1x8x16xf32> to vector<2x8x16xf32>
    %c0_1 = arith.constant 0 : index
    %c0_2 = arith.constant 0 : index
    %c0_3 = arith.constant 0 : index
    %4 = vector.load %arg1[%c0_1, %c0_2, %c0_3] : memref<2x16x128xf32, #tpu.memory_space<vmem>>, vector<2x16x128xf32>
    "tpu.trace_start"() <{level = 10 : i32, message = "gef,gft->get"}> : () -> ()
    %cst = arith.constant dense<0.000000e+00> : vector<2x8x128xf32>
    %5 = tpu.matmul %3, %4, %cst {dimension_numbers = #tpu.dot_dimension_numbers<[2], [1], [1], [2], [0, 0, 0, 1, 1, 2], [0], [0]>} : vector<2x8x16xf32>, vector<2x16x128xf32>, vector<2x8x128xf32> -> vector<2x8x128xf32>
    "tpu.trace_stop"() : () -> ()
    %c0_4 = arith.constant 0 : index
    %c0_5 = arith.constant 0 : index
    %6 = vector.load %arg3[%c0_4, %c0_5] : memref<8x128xf32, #tpu.memory_space<vmem>>, vector<8x128xf32>
    %7 = vector.shape_cast %6 : vector<8x128xf32> to vector<1x8x128xf32>
    %8 = vector.broadcast %7 : vector<1x8x128xf32> to vector<2x8x128xf32>
    %9 = arith.addf %5, %8 : vector<2x8x128xf32>
    %c0_6 = arith.constant 0 : index
    %c0_7 = arith.constant 0 : index
    %10 = vector.load %arg4[%c0_6, %c0_7] : memref<128x128xf32, #tpu.memory_space<vmem>>, vector<128x128xf32>
    %11 = vector.shape_cast %10 : vector<128x128xf32> to vector<1x128x128xf32>
    %c0_i32 = arith.constant 0 : i32
    %c8_i32 = arith.constant 8 : i32
    %12 = arith.addi %c0_i32, %c8_i32 : i32
    %c1_i32 = arith.constant 1 : i32
    %13 = scf.for %arg18 = %c0_i32 to %12 step %c1_i32 iter_args(%arg19 = %9) -> (vector<2x8x128xf32>)  : i32 {
      %24 = arith.index_cast %arg18 : i32 to index
      %c0_17 = arith.constant 0 : index
      %c0_18 = arith.constant 0 : index
      %25 = vector.load %arg5[%24, %c0_17, %c0_18] : memref<8x8x128xf32, #tpu.memory_space<vmem>>, vector<1x8x128xf32>
      %26 = vector.shape_cast %25 : vector<1x8x128xf32> to vector<8x128xf32>
      %27 = vector.shape_cast %26 : vector<8x128xf32> to vector<1x8x128xf32>
      %28 = arith.index_cast %arg18 : i32 to index
      %c0_19 = arith.constant 0 : index
      %c0_20 = arith.constant 0 : index
      %29 = vector.load %arg6[%28, %c0_19, %c0_20] : memref<8x8x128xf32, #tpu.memory_space<vmem>>, vector<1x8x128xf32>
      %30 = vector.shape_cast %29 : vector<1x8x128xf32> to vector<8x128xf32>
      %31 = vector.shape_cast %30 : vector<8x128xf32> to vector<1x8x128xf32>
      %cst_21 = arith.constant dense<0.000000e+00> : vector<2x128xf32>
      %32 = vector.multi_reduction <add>, %arg19, %cst_21 [1] : vector<2x8x128xf32> to vector<2x128xf32>
      %33 = vector.shape_cast %32 : vector<2x128xf32> to vector<2x1x128xf32>
      %cst_22 = arith.constant 8.000000e+00 : f32
      %34 = vector.broadcast %cst_22 : f32 to vector<2x1x128xf32>
      %35 = arith.divf %33, %34 : vector<2x1x128xf32>
      %36 = vector.broadcast %35 : vector<2x1x128xf32> to vector<2x8x128xf32>
      %37 = arith.subf %arg19, %36 : vector<2x8x128xf32>
      %38 = arith.mulf %37, %37 : vector<2x8x128xf32>
      %cst_23 = arith.constant dense<0.000000e+00> : vector<2x128xf32>
      %39 = vector.multi_reduction <add>, %38, %cst_23 [1] : vector<2x8x128xf32> to vector<2x128xf32>
      %40 = vector.shape_cast %39 : vector<2x128xf32> to vector<2x1x128xf32>
      %cst_24 = arith.constant 8.000000e+00 : f32
      %41 = vector.broadcast %cst_24 : f32 to vector<2x1x128xf32>
      %42 = arith.divf %40, %41 : vector<2x1x128xf32>
      %cst_25 = arith.constant 9.99999974E-6 : f32
      %43 = vector.broadcast %cst_25 : f32 to vector<2x1x128xf32>
      %44 = arith.addf %42, %43 : vector<2x1x128xf32>
      %45 = math.rsqrt %44 : vector<2x1x128xf32>
      %46 = vector.broadcast %45 : vector<2x1x128xf32> to vector<2x8x128xf32>
      %47 = arith.mulf %37, %46 : vector<2x8x128xf32>
      %48 = vector.broadcast %27 : vector<1x8x128xf32> to vector<2x8x128xf32>
      %49 = arith.mulf %47, %48 : vector<2x8x128xf32>
      %50 = vector.broadcast %31 : vector<1x8x128xf32> to vector<2x8x128xf32>
      %51 = arith.addf %49, %50 : vector<2x8x128xf32>
      %52 = arith.index_cast %arg18 : i32 to index
      %c0_26 = arith.constant 0 : index
      %c0_27 = arith.constant 0 : index
      %53 = vector.load %arg7[%52, %c0_26, %c0_27] : memref<8x24x8xf32, #tpu.memory_space<vmem>>, vector<1x24x8xf32>
      %54 = vector.shape_cast %53 : vector<1x24x8xf32> to vector<24x8xf32>
      %55 = vector.shape_cast %54 : vector<24x8xf32> to vector<1x24x8xf32>
      %56 = vector.shape_cast %55 : vector<1x24x8xf32> to vector<1x24x8xf32>
      %57 = vector.broadcast %56 : vector<1x24x8xf32> to vector<2x24x8xf32>
      "tpu.trace_start"() <{level = 10 : i32, message = "ged,gdt->get"}> : () -> ()
      %cst_28 = arith.constant dense<0.000000e+00> : vector<2x24x128xf32>
      %58 = tpu.matmul %57, %51, %cst_28 {dimension_numbers = #tpu.dot_dimension_numbers<[2], [1], [1], [2], [0, 0, 0, 1, 1, 2], [0], [0]>} : vector<2x24x8xf32>, vector<2x8x128xf32>, vector<2x24x128xf32> -> vector<2x24x128xf32>
      "tpu.trace_stop"() : () -> ()
      %59 = arith.index_cast %arg18 : i32 to index
      %c0_29 = arith.constant 0 : index
      %c0_30 = arith.constant 0 : index
      %60 = vector.load %arg8[%59, %c0_29, %c0_30] : memref<8x24x128xf32, #tpu.memory_space<vmem>>, vector<1x24x128xf32>
      %61 = vector.shape_cast %60 : vector<1x24x128xf32> to vector<24x128xf32>
      %62 = vector.shape_cast %61 : vector<24x128xf32> to vector<1x24x128xf32>
      %63 = vector.broadcast %62 : vector<1x24x128xf32> to vector<2x24x128xf32>
      %64 = arith.addf %58, %63 : vector<2x24x128xf32>
      %65 = vector.extract_strided_slice %64 {offsets = [0, 0, 0], sizes = [2, 8, 128], strides = [1, 1, 1]} : vector<2x24x128xf32> to vector<2x8x128xf32>
      %66 = vector.extract_strided_slice %64 {offsets = [0, 8, 0], sizes = [2, 8, 128], strides = [1, 1, 1]} : vector<2x24x128xf32> to vector<2x8x128xf32>
      %67 = vector.extract_strided_slice %64 {offsets = [0, 16, 0], sizes = [2, 8, 128], strides = [1, 1, 1]} : vector<2x24x128xf32> to vector<2x8x128xf32>
      %68 = tpu.transpose %65, [0, 2, 1] : vector<2x8x128xf32> -> vector<2x128x8xf32>
      "tpu.trace_start"() <{level = 10 : i32, message = "gqd,gdk->gqk"}> : () -> ()
      %cst_31 = arith.constant dense<0.000000e+00> : vector<2x128x128xf32>
      %69 = tpu.matmul %68, %66, %cst_31 {dimension_numbers = #tpu.dot_dimension_numbers<[2], [1], [1], [2], [0, 0, 0, 1, 1, 2], [0], [0]>} : vector<2x128x8xf32>, vector<2x8x128xf32>, vector<2x128x128xf32> -> vector<2x128x128xf32>
      "tpu.trace_stop"() : () -> ()
      %70 = vector.broadcast %11 : vector<1x128x128xf32> to vector<2x128x128xf32>
      %71 = arith.addf %69, %70 : vector<2x128x128xf32>
      %cst_32 = arith.constant dense<0xFF800000> : vector<2x128xf32>
      %72 = vector.multi_reduction <maximumf>, %71, %cst_32 [2] : vector<2x128x128xf32> to vector<2x128xf32>
      %73 = vector.shape_cast %72 : vector<2x128xf32> to vector<2x128x1xf32>
      %74 = vector.broadcast %73 : vector<2x128x1xf32> to vector<2x128x128xf32>
      %75 = arith.subf %71, %74 : vector<2x128x128xf32>
      %76 = math.exp %75 : vector<2x128x128xf32>
      %cst_33 = arith.constant dense<0.000000e+00> : vector<2x128xf32>
      %77 = vector.multi_reduction <add>, %76, %cst_33 [2] : vector<2x128x128xf32> to vector<2x128xf32>
      %78 = vector.shape_cast %77 : vector<2x128xf32> to vector<2x128x1xf32>
      %79 = vector.broadcast %78 : vector<2x128x1xf32> to vector<2x128x128xf32>
      %80 = arith.divf %76, %79 : vector<2x128x128xf32>
      "tpu.trace_start"() <{level = 10 : i32, message = "gek,gqk->geq"}> : () -> ()
      %cst_34 = arith.constant dense<0.000000e+00> : vector<2x8x128xf32>
      %81 = tpu.matmul %67, %80, %cst_34 {dimension_numbers = #tpu.dot_dimension_numbers<[2], [2], [1], [1], [0, 0, 0, 1, 1, 1], [0], [0]>} : vector<2x8x128xf32>, vector<2x128x128xf32>, vector<2x8x128xf32> -> vector<2x8x128xf32>
      "tpu.trace_stop"() : () -> ()
      %82 = arith.addf %arg19, %81 : vector<2x8x128xf32>
      %83 = arith.index_cast %arg18 : i32 to index
      %c0_35 = arith.constant 0 : index
      %c0_36 = arith.constant 0 : index
      %84 = vector.load %arg9[%83, %c0_35, %c0_36] : memref<8x8x128xf32, #tpu.memory_space<vmem>>, vector<1x8x128xf32>
      %85 = vector.shape_cast %84 : vector<1x8x128xf32> to vector<8x128xf32>
      %86 = vector.shape_cast %85 : vector<8x128xf32> to vector<1x8x128xf32>
      %87 = arith.index_cast %arg18 : i32 to index
      %c0_37 = arith.constant 0 : index
      %c0_38 = arith.constant 0 : index
      %88 = vector.load %arg10[%87, %c0_37, %c0_38] : memref<8x8x128xf32, #tpu.memory_space<vmem>>, vector<1x8x128xf32>
      %89 = vector.shape_cast %88 : vector<1x8x128xf32> to vector<8x128xf32>
      %90 = vector.shape_cast %89 : vector<8x128xf32> to vector<1x8x128xf32>
      %cst_39 = arith.constant dense<0.000000e+00> : vector<2x128xf32>
      %91 = vector.multi_reduction <add>, %82, %cst_39 [1] : vector<2x8x128xf32> to vector<2x128xf32>
      %92 = vector.shape_cast %91 : vector<2x128xf32> to vector<2x1x128xf32>
      %cst_40 = arith.constant 8.000000e+00 : f32
      %93 = vector.broadcast %cst_40 : f32 to vector<2x1x128xf32>
      %94 = arith.divf %92, %93 : vector<2x1x128xf32>
      %95 = vector.broadcast %94 : vector<2x1x128xf32> to vector<2x8x128xf32>
      %96 = arith.subf %82, %95 : vector<2x8x128xf32>
      %97 = arith.mulf %96, %96 : vector<2x8x128xf32>
      %cst_41 = arith.constant dense<0.000000e+00> : vector<2x128xf32>
      %98 = vector.multi_reduction <add>, %97, %cst_41 [1] : vector<2x8x128xf32> to vector<2x128xf32>
      %99 = vector.shape_cast %98 : vector<2x128xf32> to vector<2x1x128xf32>
      %cst_42 = arith.constant 8.000000e+00 : f32
      %100 = vector.broadcast %cst_42 : f32 to vector<2x1x128xf32>
      %101 = arith.divf %99, %100 : vector<2x1x128xf32>
      %cst_43 = arith.constant 9.99999974E-6 : f32
      %102 = vector.broadcast %cst_43 : f32 to vector<2x1x128xf32>
      %103 = arith.addf %101, %102 : vector<2x1x128xf32>
      %104 = math.rsqrt %103 : vector<2x1x128xf32>
      %105 = vector.broadcast %104 : vector<2x1x128xf32> to vector<2x8x128xf32>
      %106 = arith.mulf %96, %105 : vector<2x8x128xf32>
      %107 = vector.broadcast %86 : vector<1x8x128xf32> to vector<2x8x128xf32>
      %108 = arith.mulf %106, %107 : vector<2x8x128xf32>
      %109 = vector.broadcast %90 : vector<1x8x128xf32> to vector<2x8x128xf32>
      %110 = arith.addf %108, %109 : vector<2x8x128xf32>
      %111 = arith.index_cast %arg18 : i32 to index
      %c0_44 = arith.constant 0 : index
      %c0_45 = arith.constant 0 : index
      %112 = vector.load %arg11[%111, %c0_44, %c0_45] : memref<8x32x8xf32, #tpu.memory_space<vmem>>, vector<1x32x8xf32>
      %113 = vector.shape_cast %112 : vector<1x32x8xf32> to vector<32x8xf32>
      %114 = vector.shape_cast %113 : vector<32x8xf32> to vector<1x32x8xf32>
      %115 = vector.shape_cast %114 : vector<1x32x8xf32> to vector<1x32x8xf32>
      %116 = vector.broadcast %115 : vector<1x32x8xf32> to vector<2x32x8xf32>
      "tpu.trace_start"() <{level = 10 : i32, message = "gmd,gdt->gmt"}> : () -> ()
      %cst_46 = arith.constant dense<0.000000e+00> : vector<2x32x128xf32>
      %117 = tpu.matmul %116, %110, %cst_46 {dimension_numbers = #tpu.dot_dimension_numbers<[2], [1], [1], [2], [0, 0, 0, 1, 1, 2], [0], [0]>} : vector<2x32x8xf32>, vector<2x8x128xf32>, vector<2x32x128xf32> -> vector<2x32x128xf32>
      "tpu.trace_stop"() : () -> ()
      %118 = arith.index_cast %arg18 : i32 to index
      %c0_47 = arith.constant 0 : index
      %c0_48 = arith.constant 0 : index
      %119 = vector.load %arg12[%118, %c0_47, %c0_48] : memref<8x32x128xf32, #tpu.memory_space<vmem>>, vector<1x32x128xf32>
      %120 = vector.shape_cast %119 : vector<1x32x128xf32> to vector<32x128xf32>
      %121 = vector.shape_cast %120 : vector<32x128xf32> to vector<1x32x128xf32>
      %122 = vector.broadcast %121 : vector<1x32x128xf32> to vector<2x32x128xf32>
      %123 = arith.addf %117, %122 : vector<2x32x128xf32>
      %cst_49 = arith.constant 0.000000e+00 : f32
      %124 = vector.broadcast %cst_49 : f32 to vector<2x32x128xf32>
      %125 = arith.maximumf %123, %124 : vector<2x32x128xf32>
      %126 = arith.index_cast %arg18 : i32 to index
      %c0_50 = arith.constant 0 : index
      %c0_51 = arith.constant 0 : index
      %127 = vector.load %arg13[%126, %c0_50, %c0_51] : memref<8x8x32xf32, #tpu.memory_space<vmem>>, vector<1x8x32xf32>
      %128 = vector.shape_cast %127 : vector<1x8x32xf32> to vector<8x32xf32>
      %129 = vector.shape_cast %128 : vector<8x32xf32> to vector<1x8x32xf32>
      %130 = vector.shape_cast %129 : vector<1x8x32xf32> to vector<1x8x32xf32>
      %131 = vector.broadcast %130 : vector<1x8x32xf32> to vector<2x8x32xf32>
      "tpu.trace_start"() <{level = 10 : i32, message = "gem,gmt->get"}> : () -> ()
      %cst_52 = arith.constant dense<0.000000e+00> : vector<2x8x128xf32>
      %132 = tpu.matmul %131, %125, %cst_52 {dimension_numbers = #tpu.dot_dimension_numbers<[2], [1], [1], [2], [0, 0, 0, 1, 1, 2], [0], [0]>} : vector<2x8x32xf32>, vector<2x32x128xf32>, vector<2x8x128xf32> -> vector<2x8x128xf32>
      "tpu.trace_stop"() : () -> ()
      %133 = arith.index_cast %arg18 : i32 to index
      %c0_53 = arith.constant 0 : index
      %c0_54 = arith.constant 0 : index
      %134 = vector.load %arg14[%133, %c0_53, %c0_54] : memref<8x8x128xf32, #tpu.memory_space<vmem>>, vector<1x8x128xf32>
      %135 = vector.shape_cast %134 : vector<1x8x128xf32> to vector<8x128xf32>
      %136 = vector.shape_cast %135 : vector<8x128xf32> to vector<1x8x128xf32>
      %137 = vector.broadcast %136 : vector<1x8x128xf32> to vector<2x8x128xf32>
      %138 = arith.addf %132, %137 : vector<2x8x128xf32>
      %139 = arith.addf %82, %138 : vector<2x8x128xf32>
      scf.yield %139 : vector<2x8x128xf32>
    }
    %c8_i32_8 = arith.constant 8 : i32
    %c0_9 = arith.constant 0 : index
    %c0_10 = arith.constant 0 : index
    %14 = vector.load %arg15[%c0_9, %c0_10] : memref<16x8xf32, #tpu.memory_space<vmem>>, vector<16x8xf32>
    %15 = vector.shape_cast %14 : vector<16x8xf32> to vector<1x16x8xf32>
    %16 = vector.shape_cast %15 : vector<1x16x8xf32> to vector<1x16x8xf32>
    %17 = vector.broadcast %16 : vector<1x16x8xf32> to vector<2x16x8xf32>
    "tpu.trace_start"() <{level = 10 : i32, message = "gcd,gdt->gct"}> : () -> ()
    %cst_11 = arith.constant dense<0.000000e+00> : vector<2x16x128xf32>
    %18 = tpu.matmul %17, %13, %cst_11 {dimension_numbers = #tpu.dot_dimension_numbers<[2], [1], [1], [2], [0, 0, 0, 1, 1, 2], [0], [0]>} : vector<2x16x8xf32>, vector<2x8x128xf32>, vector<2x16x128xf32> -> vector<2x16x128xf32>
    "tpu.trace_stop"() : () -> ()
    %c0_12 = arith.constant 0 : index
    %c0_13 = arith.constant 0 : index
    %19 = vector.load %arg16[%c0_12, %c0_13] : memref<16x128xf32, #tpu.memory_space<vmem>>, vector<16x128xf32>
    %20 = vector.shape_cast %19 : vector<16x128xf32> to vector<1x16x128xf32>
    %21 = vector.broadcast %20 : vector<1x16x128xf32> to vector<2x16x128xf32>
    %22 = arith.addf %18, %21 : vector<2x16x128xf32>
    %c0_14 = arith.constant 0 : index
    %c0_15 = arith.constant 0 : index
    %c0_16 = arith.constant 0 : index
    %23 = vector.load %arg17[%c0_14, %c0_15, %c0_16] : memref<2x16x128xf32, #tpu.memory_space<vmem>>, vector<2x16x128xf32>
    tpu.vector_store %arg17[%c0_14, %c0_15, %c0_16], %22 {strides = array<i32>} : memref<2x16x128xf32, #tpu.memory_space<vmem>>, vector<2x16x128xf32>,
    return
  }
  func.func @transform_0(%arg0: i32) -> (i32, i32, i32) {
    %c0_i32 = arith.constant 0 : i32
    %c0_i32_0 = arith.constant 0 : i32
    %c0_i32_1 = arith.constant 0 : i32
    return %arg0, %c0_i32, %c0_i32_0 : i32, i32, i32
  }
  func.func @transform_1(%arg0: i32) -> (i32, i32) {
    %c0_i32 = arith.constant 0 : i32
    %c0_i32_0 = arith.constant 0 : i32
    %c0_i32_1 = arith.constant 0 : i32
    return %c0_i32, %c0_i32_0 : i32, i32
  }
  func.func @transform_2(%arg0: i32) -> (i32, i32) {
    %c0_i32 = arith.constant 0 : i32
    %c0_i32_0 = arith.constant 0 : i32
    %c0_i32_1 = arith.constant 0 : i32
    return %c0_i32, %c0_i32_0 : i32, i32
  }
  func.func @transform_3(%arg0: i32) -> (i32, i32) {
    %c0_i32 = arith.constant 0 : i32
    %c0_i32_0 = arith.constant 0 : i32
    %c0_i32_1 = arith.constant 0 : i32
    return %c0_i32, %c0_i32_0 : i32, i32
  }
  func.func @transform_4(%arg0: i32) -> (i32, i32, i32) {
    %c0_i32 = arith.constant 0 : i32
    %c0_i32_0 = arith.constant 0 : i32
    %c0_i32_1 = arith.constant 0 : i32
    %c0_i32_2 = arith.constant 0 : i32
    return %c0_i32, %c0_i32_0, %c0_i32_1 : i32, i32, i32
  }
  func.func @transform_5(%arg0: i32) -> (i32, i32, i32) {
    %c0_i32 = arith.constant 0 : i32
    %c0_i32_0 = arith.constant 0 : i32
    %c0_i32_1 = arith.constant 0 : i32
    %c0_i32_2 = arith.constant 0 : i32
    return %c0_i32, %c0_i32_0, %c0_i32_1 : i32, i32, i32
  }
  func.func @transform_6(%arg0: i32) -> (i32, i32, i32) {
    %c0_i32 = arith.constant 0 : i32
    %c0_i32_0 = arith.constant 0 : i32
    %c0_i32_1 = arith.constant 0 : i32
    %c0_i32_2 = arith.constant 0 : i32
    return %c0_i32, %c0_i32_0, %c0_i32_1 : i32, i32, i32
  }
  func.func @transform_7(%arg0: i32) -> (i32, i32, i32) {
    %c0_i32 = arith.constant 0 : i32
    %c0_i32_0 = arith.constant 0 : i32
    %c0_i32_1 = arith.constant 0 : i32
    %c0_i32_2 = arith.constant 0 : i32
    return %c0_i32, %c0_i32_0, %c0_i32_1 : i32, i32, i32
  }
  func.func @transform_8(%arg0: i32) -> (i32, i32, i32) {
    %c0_i32 = arith.constant 0 : i32
    %c0_i32_0 = arith.constant 0 : i32
    %c0_i32_1 = arith.constant 0 : i32
    %c0_i32_2 = arith.constant 0 : i32
    return %c0_i32, %c0_i32_0, %c0_i32_1 : i32, i32, i32
  }
  func.func @transform_9(%arg0: i32) -> (i32, i32, i32) {
    %c0_i32 = arith.constant 0 : i32
    %c0_i32_0 = arith.constant 0 : i32
    %c0_i32_1 = arith.constant 0 : i32
    %c0_i32_2 = arith.constant 0 : i32
    return %c0_i32, %c0_i32_0, %c0_i32_1 : i32, i32, i32
  }
  func.func @transform_10(%arg0: i32) -> (i32, i32, i32) {
    %c0_i32 = arith.constant 0 : i32
    %c0_i32_0 = arith.constant 0 : i32
    %c0_i32_1 = arith.constant 0 : i32
    %c0_i32_2 = arith.constant 0 : i32
    return %c0_i32, %c0_i32_0, %c0_i32_1 : i32, i32, i32
  }
  func.func @transform_11(%arg0: i32) -> (i32, i32, i32) {
    %c0_i32 = arith.constant 0 : i32
    %c0_i32_0 = arith.constant 0 : i32
    %c0_i32_1 = arith.constant 0 : i32
    %c0_i32_2 = arith.constant 0 : i32
    return %c0_i32, %c0_i32_0, %c0_i32_1 : i32, i32, i32
  }
  func.func @transform_12(%arg0: i32) -> (i32, i32, i32) {
    %c0_i32 = arith.constant 0 : i32
    %c0_i32_0 = arith.constant 0 : i32
    %c0_i32_1 = arith.constant 0 : i32
    %c0_i32_2 = arith.constant 0 : i32
    return %c0_i32, %c0_i32_0, %c0_i32_1 : i32, i32, i32
  }
  func.func @transform_13(%arg0: i32) -> (i32, i32, i32) {
    %c0_i32 = arith.constant 0 : i32
    %c0_i32_0 = arith.constant 0 : i32
    %c0_i32_1 = arith.constant 0 : i32
    %c0_i32_2 = arith.constant 0 : i32
    return %c0_i32, %c0_i32_0, %c0_i32_1 : i32, i32, i32
  }
  func.func @transform_14(%arg0: i32) -> (i32, i32) {
    %c0_i32 = arith.constant 0 : i32
    %c0_i32_0 = arith.constant 0 : i32
    %c0_i32_1 = arith.constant 0 : i32
    return %c0_i32, %c0_i32_0 : i32, i32
  }
  func.func @transform_15(%arg0: i32) -> (i32, i32) {
    %c0_i32 = arith.constant 0 : i32
    %c0_i32_0 = arith.constant 0 : i32
    %c0_i32_1 = arith.constant 0 : i32
    return %c0_i32, %c0_i32_0 : i32, i32
  }
  func.func @transform_16(%arg0: i32) -> (i32, i32, i32) {
    %c0_i32 = arith.constant 0 : i32
    %c0_i32_0 = arith.constant 0 : i32
    %c0_i32_1 = arith.constant 0 : i32
    return %arg0, %c0_i32, %c0_i32_0 : i32, i32, i32
  }
}

</mosaic_0001>

<llo_original>
// kernel: tpu_custom_call.1
$region0: #{tpu_custom_call.1}
  #allocation0 [shape = 'u32[]', space=smem, size = 0x4, offset = 0x4, fixed_abs, tag = 'smem constant byte address 0x4 - core index']
  #allocation1 [shape = 'u32[144,128]{1,0:T(1,128)}', space=vmem, size = 0x12000, scoped, tag = 'internal scratch']
  %s0 = inlined_call_operand.hbm [shape: f32[4,16,128], index: 0, kind: input, shape index: {}]
  %s1 = inlined_call_operand.hbm [shape: f32[8,16], index: 1, kind: input, shape index: {}]
  %s2 = inlined_call_operand.hbm [shape: f32[8,128], index: 2, kind: input, shape index: {}]
  %s3 = inlined_call_operand.vmem [shape: f32[128,128], index: 3, kind: input, shape index: {}]
  %s4 = inlined_call_operand.hbm [shape: f32[8,8,128], index: 4, kind: input, shape index: {}]
  %s5 = inlined_call_operand.hbm [shape: f32[8,8,128], index: 5, kind: input, shape index: {}]
  %s6 = inlined_call_operand.vmem [shape: f32[8,24,8], index: 6, kind: input, shape index: {}]
  %s7 = inlined_call_operand.vmem [shape: f32[8,24,128], index: 7, kind: input, shape index: {}]
  %s8 = inlined_call_operand.hbm [shape: f32[8,8,128], index: 8, kind: input, shape index: {}]
  %s9 = inlined_call_operand.hbm [shape: f32[8,8,128], index: 9, kind: input, shape index: {}]
  %s10 = inlined_call_operand.vmem [shape: f32[8,32,8], index: 10, kind: input, shape index: {}]
  %s11 = inlined_call_operand.vmem [shape: f32[8,32,128], index: 11, kind: input, shape index: {}]
  %s12 = inlined_call_operand.vmem [shape: f32[8,8,32], index: 12, kind: input, shape index: {}]
  %s13 = inlined_call_operand.hbm [shape: f32[8,8,128], index: 13, kind: input, shape index: {}]
  %s14 = inlined_call_operand.vmem [shape: f32[16,8], index: 14, kind: input, shape index: {}]
  %s15 = inlined_call_operand.hbm [shape: f32[16,128], index: 15, kind: input, shape index: {}]
  %s16 = inlined_call_operand.hbm [shape: f32[4,16,128], index: 16, kind: output, shape index: {}]
  %s17 = sld [smem:[#allocation0]]
  $region140: #{tpu_custom_call.1} parent=0
    _
  %s19 = ssub.s32 1, %s17
  %s20 = scalar_select 0, %s19, %s17
  $region1: #{tpu_custom_call.1} parent=0
    #allocation2 [shape = 'u8[32768]{0}', space=vmem, size = 0x8000, scoped, tag = 'input window, operand 0']
    #allocation3 [shape = 's32[2]{0}', space=sflag, size = 0x8, scoped, tag = 'scoped memory for tpu_custom_call.1']
    #allocation4 [shape = 's32[2]{0}', space=sflag, size = 0x8, scoped, tag = 'scoped memory for tpu_custom_call.1']
    #allocation5 [shape = 'u8[4096]{0}', space=vmem, size = 0x1000, scoped, tag = 'input window, operand 1, single buffered']
    #allocation6 [shape = 's32[1]{0}', space=sflag, size = 0x4, scoped, tag = 'scoped memory for tpu_custom_call.1']
    #allocation7 [shape = 'u8[4096]{0}', space=vmem, size = 0x1000, scoped, tag = 'input window, operand 2, single buffered']
    #allocation8 [shape = 'u8[32768]{0}', space=vmem, size = 0x8000, scoped, tag = 'input window, operand 4, single buffered']
    #allocation9 [shape = 's32[1]{0}', space=sflag, size = 0x4, scoped, tag = 'scoped memory for tpu_custom_call.1']
    #allocation10 [shape = 'u8[32768]{0}', space=vmem, size = 0x8000, scoped, tag = 'input window, operand 5, single buffered']
    #allocation11 [shape = 'u8[32768]{0}', space=vmem, size = 0x8000, scoped, tag = 'input window, operand 8, single buffered']
    #allocation12 [shape = 's32[1]{0}', space=sflag, size = 0x4, scoped, tag = 'scoped memory for tpu_custom_call.1']
    #allocation13 [shape = 'u8[32768]{0}', space=vmem, size = 0x8000, scoped, tag = 'input window, operand 9, single buffered']
    #allocation14 [shape = 'u8[32768]{0}', space=vmem, size = 0x8000, scoped, tag = 'input window, operand 13, single buffered']
    #allocation15 [shape = 's32[1]{0}', space=sflag, size = 0x4, scoped, tag = 'scoped memory for tpu_custom_call.1']
    #allocation16 [shape = 'u8[8192]{0}', space=vmem, size = 0x2000, scoped, tag = 'input window, operand 15, single buffered']
    #allocation17 [shape = 'u8[32768]{0}', space=vmem, size = 0x8000, scoped, tag = 'output window, operand 0']
    %21 = vsyncpa [#allocation3], 0
    %s22 = scalar_lea.sflag [#allocation3], 1
    %23 = vsyncpa %s22, 0
    %24 = vsyncpa [#allocation6], 0
    %25 = vsyncpa [#allocation9], 0
    %26 = vsyncpa [#allocation12], 0
    %27 = vsyncpa [#allocation15], 0
    %28 = vsyncpa [#allocation4], 0
    %s29 = scalar_lea.sflag [#allocation4], 1
    %30 = vsyncpa %s29, 0
    loop: start=0, step=1, limit=4
    $region2: #{tpu_custom_call.1} parent=1 // loop_pre_header
      _
    $region3: #{tpu_custom_call.1} parent=1 // loop_header
      %s32 = sphi 0, %s36
      %p33 = scmp.ge.s32.totalorder %s32, 4
      %s42 = sphi 0, %s44
      %s45 = sphi 0, %s42
      %s46 = sphi 0, %s45
      %s62 = sphi 0, %s46
      %s66 = sphi 0, %s66
      %s68 = sphi 0, %s66
      %s69 = sphi 0, %s68
      %s83 = sphi 0, %s69
      %s87 = sphi 0, %s87
      %s89 = sphi 0, %s87
      %s90 = sphi 0, %s89
      %s104 = sphi 0, %s90
      %s108 = sphi 0, %s108
      %s110 = sphi 0, %s108
      %s111 = sphi 0, %s110
      %s125 = sphi 0, %s111
      %s129 = sphi 0, %s129
      %s131 = sphi 0, %s129
      %s132 = sphi 0, %s131
      %s146 = sphi 0, %s132
      %s150 = sphi 0, %s150
      %s152 = sphi 0, %s150
      %s153 = sphi 0, %s152
      %s167 = sphi 0, %s153
      %s171 = sphi 0, %s171
      %s173 = sphi 0, %s171
      %s174 = sphi 0, %s173
      %s188 = sphi 0, %s174
      %s192 = sphi 0, %s192
      %s194 = sphi 0, %s192
      %s195 = sphi 0, %s194
      %s209 = sphi 0, %s195
      %s213 = sphi 0, %s213
      %s215 = sphi 0, %s213
      %s216 = sphi 0, %s215
      %s230 = sphi 0, %s216
      %s234 = sphi 0, %s234
      %s236 = sphi 0, %s234
      %s237 = sphi 0, %s236
      %s251 = sphi 0, %s237
      %s255 = sphi 0, %s255
      %s257 = sphi 0, %s255
      %s258 = sphi 0, %s257
      %s272 = sphi 0, %s258
      %s276 = sphi 0, %s276
      %s278 = sphi 0, %s276
      %s279 = sphi 0, %s278
      %s293 = sphi 0, %s279
      %s297 = sphi 0, %s297
      %s299 = sphi 0, %s297
      %s300 = sphi 0, %s299
      %s314 = sphi 0, %s300
      %s318 = sphi 0, %s318
      %s320 = sphi 0, %s318
      %s321 = sphi 0, %s320
      %s335 = sphi 0, %s321
      %s339 = sphi 0, %s339
      %s341 = sphi 0, %s339
      %s342 = sphi 0, %s341
      %s356 = sphi 0, %s342
      %s360 = sphi 0, %s360
      %s362 = sphi 0, %s360
      %s363 = sphi 0, %s362
      %s377 = sphi 0, %s363
      %s383 = sphi 0, %s385
      %s386 = sphi 0, %s383
      %s387 = sphi 0, %s386
      %s403 = sphi 0, %s387
    $region4: #{tpu_custom_call.1} parent=1 // loop_header_branch
      %35 = sbr.rel (%p33) target = $region8
    $region5: #{tpu_custom_call.1} parent=1 // loop_body
      %s37 = ssub.s32 %s32, 1
      %s38 = ssub.s32 %s32, 2
      %s39 = sadd.s32 %s32, 1
      %s40 = ssub.s32 %s32, %s39
      %p41 = scmp.eq.s32.totalorder %s40, 0
      %s43 = sadd.s32 %s42, 1
      %s44 = scalar_select %p41, %s42, %s43
      %p47 = pneg %p41
      %p48 = scmp.eq.s32.totalorder %s32, 1
      %p49 = por %p47, %p48
      %p50 = scmp.ne.s32.totalorder %s42, %s45
      %p51 = scmp.eq.s32.totalorder %s32, 0
      %p52 = por %p50, %p51
      %p53 = scmp.ne.s32.totalorder %s42, %s45
      %p54 = scmp.eq.s32.totalorder %s37, 1
      %p55 = por %p53, %p54
      %p56 = scmp.ne.s32.totalorder %s45, %s46
      %p57 = scmp.eq.s32.totalorder %s37, 0
      %p58 = por %p56, %p57
      %p59 = scmp.ne.s32.totalorder %s45, %s46
      %p60 = scmp.eq.s32.totalorder %s38, 1
      %p61 = por %p59, %p60
      %p63 = scmp.ne.s32.totalorder %s46, %s62
      %p64 = scmp.eq.s32.totalorder %s38, 0
      %p65 = por %p63, %p64
      %s67 = sadd.s32 %s66, 1
      %p70 = scmp.eq.s32.totalorder %s32, 1
      %p71 = scmp.ne.s32.totalorder %s66, %s68
      %p72 = scmp.eq.s32.totalorder %s32, 0
      %p73 = por %p71, %p72
      %p74 = scmp.ne.s32.totalorder %s66, %s68
      %p75 = scmp.eq.s32.totalorder %s37, 1
      %p76 = por %p74, %p75
      %p77 = scmp.ne.s32.totalorder %s68, %s69
      %p78 = scmp.eq.s32.totalorder %s37, 0
      %p79 = por %p77, %p78
      %p80 = scmp.ne.s32.totalorder %s68, %s69
      %p81 = scmp.eq.s32.totalorder %s38, 1
      %p82 = por %p80, %p81
      %p84 = scmp.ne.s32.totalorder %s69, %s83
      %p85 = scmp.eq.s32.totalorder %s38, 0
      %p86 = por %p84, %p85
      %s88 = sadd.s32 %s87, 1
      %p91 = scmp.eq.s32.totalorder %s32, 1
      %p92 = scmp.ne.s32.totalorder %s87, %s89
      %p93 = scmp.eq.s32.totalorder %s32, 0
      %p94 = por %p92, %p93
      %p95 = scmp.ne.s32.totalorder %s87, %s89
      %p96 = scmp.eq.s32.totalorder %s37, 1
      %p97 = por %p95, %p96
      %p98 = scmp.ne.s32.totalorder %s89, %s90
      %p99 = scmp.eq.s32.totalorder %s37, 0
      %p100 = por %p98, %p99
      %p101 = scmp.ne.s32.totalorder %s89, %s90
      %p102 = scmp.eq.s32.totalorder %s38, 1
      %p103 = por %p101, %p102
      %p105 = scmp.ne.s32.totalorder %s90, %s104
      %p106 = scmp.eq.s32.totalorder %s38, 0
      %p107 = por %p105, %p106
      %s109 = sadd.s32 %s108, 1
      %p112 = scmp.eq.s32.totalorder %s32, 1
      %p113 = scmp.ne.s32.totalorder %s108, %s110
      %p114 = scmp.eq.s32.totalorder %s32, 0
      %p115 = por %p113, %p114
      %p116 = scmp.ne.s32.totalorder %s108, %s110
      %p117 = scmp.eq.s32.totalorder %s37, 1
      %p118 = por %p116, %p117
      %p119 = scmp.ne.s32.totalorder %s110, %s111
      %p120 = scmp.eq.s32.totalorder %s37, 0
      %p121 = por %p119, %p120
      %p122 = scmp.ne.s32.totalorder %s110, %s111
      %p123 = scmp.eq.s32.totalorder %s38, 1
      %p124 = por %p122, %p123
      %p126 = scmp.ne.s32.totalorder %s111, %s125
      %p127 = scmp.eq.s32.totalorder %s38, 0
      %p128 = por %p126, %p127
      %s130 = sadd.s32 %s129, 1
      %p133 = scmp.eq.s32.totalorder %s32, 1
      %p134 = scmp.ne.s32.totalorder %s129, %s131
      %p135 = scmp.eq.s32.totalorder %s32, 0
      %p136 = por %p134, %p135
      %p137 = scmp.ne.s32.totalorder %s129, %s131
      %p138 = scmp.eq.s32.totalorder %s37, 1
      %p139 = por %p137, %p138
      %p140 = scmp.ne.s32.totalorder %s131, %s132
      %p141 = scmp.eq.s32.totalorder %s37, 0
      %p142 = por %p140, %p141
      %p143 = scmp.ne.s32.totalorder %s131, %s132
      %p144 = scmp.eq.s32.totalorder %s38, 1
      %p145 = por %p143, %p144
      %p147 = scmp.ne.s32.totalorder %s132, %s146
      %p148 = scmp.eq.s32.totalorder %s38, 0
      %p149 = por %p147, %p148
      %s151 = sadd.s32 %s150, 1
      %p154 = scmp.eq.s32.totalorder %s32, 1
      %p155 = scmp.ne.s32.totalorder %s150, %s152
      %p156 = scmp.eq.s32.totalorder %s32, 0
      %p157 = por %p155, %p156
      %p158 = scmp.ne.s32.totalorder %s150, %s152
      %p159 = scmp.eq.s32.totalorder %s37, 1
      %p160 = por %p158, %p159
      %p161 = scmp.ne.s32.totalorder %s152, %s153
      %p162 = scmp.eq.s32.totalorder %s37, 0
      %p163 = por %p161, %p162
      %p164 = scmp.ne.s32.totalorder %s152, %s153
      %p165 = scmp.eq.s32.totalorder %s38, 1
      %p166 = por %p164, %p165
      %p168 = scmp.ne.s32.totalorder %s153, %s167
      %p169 = scmp.eq.s32.totalorder %s38, 0
      %p170 = por %p168, %p169
      %s172 = sadd.s32 %s171, 1
      %p175 = scmp.eq.s32.totalorder %s32, 1
      %p176 = scmp.ne.s32.totalorder %s171, %s173
      %p177 = scmp.eq.s32.totalorder %s32, 0
      %p178 = por %p176, %p177
      %p179 = scmp.ne.s32.totalorder %s171, %s173
      %p180 = scmp.eq.s32.totalorder %s37, 1
      %p181 = por %p179, %p180
      %p182 = scmp.ne.s32.totalorder %s173, %s174
      %p183 = scmp.eq.s32.totalorder %s37, 0
      %p184 = por %p182, %p183
      %p185 = scmp.ne.s32.totalorder %s173, %s174
      %p186 = scmp.eq.s32.totalorder %s38, 1
      %p187 = por %p185, %p186
      %p189 = scmp.ne.s32.totalorder %s174, %s188
      %p190 = scmp.eq.s32.totalorder %s38, 0
      %p191 = por %p189, %p190
      %s193 = sadd.s32 %s192, 1
      %p196 = scmp.eq.s32.totalorder %s32, 1
      %p197 = scmp.ne.s32.totalorder %s192, %s194
      %p198 = scmp.eq.s32.totalorder %s32, 0
      %p199 = por %p197, %p198
      %p200 = scmp.ne.s32.totalorder %s192, %s194
      %p201 = scmp.eq.s32.totalorder %s37, 1
      %p202 = por %p200, %p201
      %p203 = scmp.ne.s32.totalorder %s194, %s195
      %p204 = scmp.eq.s32.totalorder %s37, 0
      %p205 = por %p203, %p204
      %p206 = scmp.ne.s32.totalorder %s194, %s195
      %p207 = scmp.eq.s32.totalorder %s38, 1
      %p208 = por %p206, %p207
      %p210 = scmp.ne.s32.totalorder %s195, %s209
      %p211 = scmp.eq.s32.totalorder %s38, 0
      %p212 = por %p210, %p211
      %s214 = sadd.s32 %s213, 1
      %p217 = scmp.eq.s32.totalorder %s32, 1
      %p218 = scmp.ne.s32.totalorder %s213, %s215
      %p219 = scmp.eq.s32.totalorder %s32, 0
      %p220 = por %p218, %p219
      %p221 = scmp.ne.s32.totalorder %s213, %s215
      %p222 = scmp.eq.s32.totalorder %s37, 1
      %p223 = por %p221, %p222
      %p224 = scmp.ne.s32.totalorder %s215, %s216
      %p225 = scmp.eq.s32.totalorder %s37, 0
      %p226 = por %p224, %p225
      %p227 = scmp.ne.s32.totalorder %s215, %s216
      %p228 = scmp.eq.s32.totalorder %s38, 1
      %p229 = por %p227, %p228
      %p231 = scmp.ne.s32.totalorder %s216, %s230
      %p232 = scmp.eq.s32.totalorder %s38, 0
      %p233 = por %p231, %p232
      %s235 = sadd.s32 %s234, 1
      %p238 = scmp.eq.s32.totalorder %s32, 1
      %p239 = scmp.ne.s32.totalorder %s234, %s236
      %p240 = scmp.eq.s32.totalorder %s32, 0
      %p241 = por %p239, %p240
      %p242 = scmp.ne.s32.totalorder %s234, %s236
      %p243 = scmp.eq.s32.totalorder %s37, 1
      %p244 = por %p242, %p243
      %p245 = scmp.ne.s32.totalorder %s236, %s237
      %p246 = scmp.eq.s32.totalorder %s37, 0
      %p247 = por %p245, %p246
      %p248 = scmp.ne.s32.totalorder %s236, %s237
      %p249 = scmp.eq.s32.totalorder %s38, 1
      %p250 = por %p248, %p249
      %p252 = scmp.ne.s32.totalorder %s237, %s251
      %p253 = scmp.eq.s32.totalorder %s38, 0
      %p254 = por %p252, %p253
      %s256 = sadd.s32 %s255, 1
      %p259 = scmp.eq.s32.totalorder %s32, 1
      %p260 = scmp.ne.s32.totalorder %s255, %s257
      %p261 = scmp.eq.s32.totalorder %s32, 0
      %p262 = por %p260, %p261
      %p263 = scmp.ne.s32.totalorder %s255, %s257
      %p264 = scmp.eq.s32.totalorder %s37, 1
      %p265 = por %p263, %p264
      %p266 = scmp.ne.s32.totalorder %s257, %s258
      %p267 = scmp.eq.s32.totalorder %s37, 0
      %p268 = por %p266, %p267
      %p269 = scmp.ne.s32.totalorder %s257, %s258
      %p270 = scmp.eq.s32.totalorder %s38, 1
      %p271 = por %p269, %p270
      %p273 = scmp.ne.s32.totalorder %s258, %s272
      %p274 = scmp.eq.s32.totalorder %s38, 0
      %p275 = por %p273, %p274
      %s277 = sadd.s32 %s276, 1
      %p280 = scmp.eq.s32.totalorder %s32, 1
      %p281 = scmp.ne.s32.totalorder %s276, %s278
      %p282 = scmp.eq.s32.totalorder %s32, 0
      %p283 = por %p281, %p282
      %p284 = scmp.ne.s32.totalorder %s276, %s278
      %p285 = scmp.eq.s32.totalorder %s37, 1
      %p286 = por %p284, %p285
      %p287 = scmp.ne.s32.totalorder %s278, %s279
      %p288 = scmp.eq.s32.totalorder %s37, 0
      %p289 = por %p287, %p288
      %p290 = scmp.ne.s32.totalorder %s278, %s279
      %p291 = scmp.eq.s32.totalorder %s38, 1
      %p292 = por %p290, %p291
      %p294 = scmp.ne.s32.totalorder %s279, %s293
      %p295 = scmp.eq.s32.totalorder %s38, 0
      %p296 = por %p294, %p295
      %s298 = sadd.s32 %s297, 1
      %p301 = scmp.eq.s32.totalorder %s32, 1
      %p302 = scmp.ne.s32.totalorder %s297, %s299
      %p303 = scmp.eq.s32.totalorder %s32, 0
      %p304 = por %p302, %p303
      %p305 = scmp.ne.s32.totalorder %s297, %s299
      %p306 = scmp.eq.s32.totalorder %s37, 1
      %p307 = por %p305, %p306
      %p308 = scmp.ne.s32.totalorder %s299, %s300
      %p309 = scmp.eq.s32.totalorder %s37, 0
      %p310 = por %p308, %p309
      %p311 = scmp.ne.s32.totalorder %s299, %s300
      %p312 = scmp.eq.s32.totalorder %s38, 1
      %p313 = por %p311, %p312
      %p315 = scmp.ne.s32.totalorder %s300, %s314
      %p316 = scmp.eq.s32.totalorder %s38, 0
      %p317 = por %p315, %p316
      %s319 = sadd.s32 %s318, 1
      %p322 = scmp.eq.s32.totalorder %s32, 1
      %p323 = scmp.ne.s32.totalorder %s318, %s320
      %p324 = scmp.eq.s32.totalorder %s32, 0
      %p325 = por %p323, %p324
      %p326 = scmp.ne.s32.totalorder %s318, %s320
      %p327 = scmp.eq.s32.totalorder %s37, 1
      %p328 = por %p326, %p327
      %p329 = scmp.ne.s32.totalorder %s320, %s321
      %p330 = scmp.eq.s32.totalorder %s37, 0
      %p331 = por %p329, %p330
      %p332 = scmp.ne.s32.totalorder %s320, %s321
      %p333 = scmp.eq.s32.totalorder %s38, 1
      %p334 = por %p332, %p333
      %p336 = scmp.ne.s32.totalorder %s321, %s335
      %p337 = scmp.eq.s32.totalorder %s38, 0
      %p338 = por %p336, %p337
      %s340 = sadd.s32 %s339, 1
      %p343 = scmp.eq.s32.totalorder %s32, 1
      %p344 = scmp.ne.s32.totalorder %s339, %s341
      %p345 = scmp.eq.s32.totalorder %s32, 0
      %p346 = por %p344, %p345
      %p347 = scmp.ne.s32.totalorder %s339, %s341
      %p348 = scmp.eq.s32.totalorder %s37, 1
      %p349 = por %p347, %p348
      %p350 = scmp.ne.s32.totalorder %s341, %s342
      %p351 = scmp.eq.s32.totalorder %s37, 0
      %p352 = por %p350, %p351
      %p353 = scmp.ne.s32.totalorder %s341, %s342
      %p354 = scmp.eq.s32.totalorder %s38, 1
      %p355 = por %p353, %p354
      %p357 = scmp.ne.s32.totalorder %s342, %s356
      %p358 = scmp.eq.s32.totalorder %s38, 0
      %p359 = por %p357, %p358
      %s361 = sadd.s32 %s360, 1
      %p364 = scmp.eq.s32.totalorder %s32, 1
      %p365 = scmp.ne.s32.totalorder %s360, %s362
      %p366 = scmp.eq.s32.totalorder %s32, 0
      %p367 = por %p365, %p366
      %p368 = scmp.ne.s32.totalorder %s360, %s362
      %p369 = scmp.eq.s32.totalorder %s37, 1
      %p370 = por %p368, %p369
      %p371 = scmp.ne.s32.totalorder %s362, %s363
      %p372 = scmp.eq.s32.totalorder %s37, 0
      %p373 = por %p371, %p372
      %p374 = scmp.ne.s32.totalorder %s362, %s363
      %p375 = scmp.eq.s32.totalorder %s38, 1
      %p376 = por %p374, %p375
      %p378 = scmp.ne.s32.totalorder %s363, %s377
      %p379 = scmp.eq.s32.totalorder %s38, 0
      %p380 = por %p378, %p379
      %s381 = ssub.s32 %s32, %s39
      %p382 = scmp.eq.s32.totalorder %s381, 0
      %s384 = sadd.s32 %s383, 1
      %s385 = scalar_select %p382, %s383, %s384
      %p388 = pneg %p382
      %p389 = scmp.eq.s32.totalorder %s32, 1
      %p390 = por %p388, %p389
      %p391 = scmp.ne.s32.totalorder %s383, %s386
      %p392 = scmp.eq.s32.totalorder %s32, 0
      %p393 = por %p391, %p392
      %p394 = scmp.ne.s32.totalorder %s383, %s386
      %p395 = scmp.eq.s32.totalorder %s37, 1
      %p396 = por %p394, %p395
      %p397 = scmp.ne.s32.totalorder %s386, %s387
      %p398 = scmp.eq.s32.totalorder %s37, 0
      %p399 = por %p397, %p398
      %p400 = scmp.ne.s32.totalorder %s386, %s387
      %p401 = scmp.eq.s32.totalorder %s38, 1
      %p402 = por %p400, %p401
      %p404 = scmp.ne.s32.totalorder %s387, %s403
      %p405 = scmp.eq.s32.totalorder %s38, 0
      %p406 = por %p404, %p405
      %p407 = scmp.le.s32.totalorder 1, %s32
      %p408 = scmp.lt.s32.totalorder %s32, 3
      %p409 = pnand %p407, %p408
      %p410 = pneg %p409
      // Predicated region
      $region9: #{tpu_custom_call.1} parent=5 // pred_check
        _
      $region10: #{tpu_custom_call.1} parent=5 // pred_check_branch
        %412 = sbr.rel (%p409) target = $region12
      $region11: #{tpu_custom_call.1} parent=5 // pred_region
        %s413 = ssub.s32 %s32, 1
        // Predicated region
        $region13: #{tpu_custom_call.1} parent=11 // pred_check
          %p414 = pneg %p79
        $region14: #{tpu_custom_call.1} parent=11 // pred_check_branch
          %416 = sbr.rel (%p414) target = $region16
        $region15: #{tpu_custom_call.1} parent=11 // pred_region
          %s418 = ssub.s32 128, 128
          %419 = vsyncadd [#allocation6], %s418
          %s421 = sshll.u32 [#allocation5], 4
          %s422 = int_to_ptr.vmem [resolvable:$true] %s421
          %424 = dma.hbm_to_vmem [thread:$0]  %s1, 128, %s422, [#allocation6]
        $region16: #{tpu_custom_call.1} parent=11 // pred_fallthru
          _
        // Predicated region
        $region17: #{tpu_custom_call.1} parent=11 // pred_check
          %p425 = pneg %p100
        $region18: #{tpu_custom_call.1} parent=11 // pred_check_branch
          %427 = sbr.rel (%p425) target = $region20
        $region19: #{tpu_custom_call.1} parent=11 // pred_region
          %s429 = ssub.s32 128, 128
          %430 = vsyncadd [#allocation6], %s429
          %s432 = sshll.u32 [#allocation7], 4
          %s433 = int_to_ptr.vmem [resolvable:$true] %s432
          %435 = dma.hbm_to_vmem [thread:$0]  %s2, 128, %s433, [#allocation6]
        $region20: #{tpu_custom_call.1} parent=11 // pred_fallthru
          _
        // Predicated region
        $region21: #{tpu_custom_call.1} parent=11 // pred_check
          %p436 = pneg %p121
        $region22: #{tpu_custom_call.1} parent=11 // pred_check_branch
          %438 = sbr.rel (%p436) target = $region24
        $region23: #{tpu_custom_call.1} parent=11 // pred_region
          _
        $region24: #{tpu_custom_call.1} parent=11 // pred_fallthru
          _
        // Predicated region
        $region25: #{tpu_custom_call.1} parent=11 // pred_check
          %p439 = pneg %p142
        $region26: #{tpu_custom_call.1} parent=11 // pred_check_branch
          %441 = sbr.rel (%p439) target = $region28
        $region27: #{tpu_custom_call.1} parent=11 // pred_region
          %s443 = ssub.s32 1024, 1024
          %444 = vsyncadd [#allocation9], %s443
          %s445 = sshll.u32 [#allocation8], 4
          %s446 = int_to_ptr.vmem [resolvable:$true] %s445
          %451 = dma.hbm_to_vmem [thread:$0]  %s4, 1024, %s446, [#allocation9], 128, 128, 8
        $region28: #{tpu_custom_call.1} parent=11 // pred_fallthru
          _
        // Predicated region
        $region29: #{tpu_custom_call.1} parent=11 // pred_check
          %p452 = pneg %p163
        $region30: #{tpu_custom_call.1} parent=11 // pred_check_branch
          %454 = sbr.rel (%p452) target = $region32
        $region31: #{tpu_custom_call.1} parent=11 // pred_region
          %s456 = ssub.s32 1024, 1024
          %457 = vsyncadd [#allocation9], %s456
          %s458 = sshll.u32 [#allocation10], 4
          %s459 = int_to_ptr.vmem [resolvable:$true] %s458
          %464 = dma.hbm_to_vmem [thread:$0]  %s5, 1024, %s459, [#allocation9], 128, 128, 8
        $region32: #{tpu_custom_call.1} parent=11 // pred_fallthru
          _
        // Predicated region
        $region33: #{tpu_custom_call.1} parent=11 // pred_check
          %p465 = pneg %p184
        $region34: #{tpu_custom_call.1} parent=11 // pred_check_branch
          %467 = sbr.rel (%p465) target = $region36
        $region35: #{tpu_custom_call.1} parent=11 // pred_region
          _
        $region36: #{tpu_custom_call.1} parent=11 // pred_fallthru
          _
        // Predicated region
        $region37: #{tpu_custom_call.1} parent=11 // pred_check
          %p468 = pneg %p205
        $region38: #{tpu_custom_call.1} parent=11 // pred_check_branch
          %470 = sbr.rel (%p468) target = $region40
        $region39: #{tpu_custom_call.1} parent=11 // pred_region
          _
        $region40: #{tpu_custom_call.1} parent=11 // pred_fallthru
          _
        // Predicated region
        $region41: #{tpu_custom_call.1} parent=11 // pred_check
          %p471 = pneg %p226
        $region42: #{tpu_custom_call.1} parent=11 // pred_check_branch
          %473 = sbr.rel (%p471) target = $region44
        $region43: #{tpu_custom_call.1} parent=11 // pred_region
          %s475 = ssub.s32 1024, 1024
          %476 = vsyncadd [#allocation12], %s475
          %s477 = sshll.u32 [#allocation11], 4
          %s478 = int_to_ptr.vmem [resolvable:$true] %s477
          %483 = dma.hbm_to_vmem [thread:$0]  %s8, 1024, %s478, [#allocation12], 128, 128, 8
        $region44: #{tpu_custom_call.1} parent=11 // pred_fallthru
          _
        // Predicated region
        $region45: #{tpu_custom_call.1} parent=11 // pred_check
          %p484 = pneg %p247
        $region46: #{tpu_custom_call.1} parent=11 // pred_check_branch
          %486 = sbr.rel (%p484) target = $region48
        $region47: #{tpu_custom_call.1} parent=11 // pred_region
          %s488 = ssub.s32 1024, 1024
          %489 = vsyncadd [#allocation12], %s488
          %s490 = sshll.u32 [#allocation13], 4
          %s491 = int_to_ptr.vmem [resolvable:$true] %s490
          %496 = dma.hbm_to_vmem [thread:$0]  %s9, 1024, %s491, [#allocation12], 128, 128, 8
        $region48: #{tpu_custom_call.1} parent=11 // pred_fallthru
          _
        // Predicated region
        $region49: #{tpu_custom_call.1} parent=11 // pred_check
          %p497 = pneg %p268
        $region50: #{tpu_custom_call.1} parent=11 // pred_check_branch
          %499 = sbr.rel (%p497) target = $region52
        $region51: #{tpu_custom_call.1} parent=11 // pred_region
          _
        $region52: #{tpu_custom_call.1} parent=11 // pred_fallthru
          _
        // Predicated region
        $region53: #{tpu_custom_call.1} parent=11 // pred_check
          %p500 = pneg %p289
        $region54: #{tpu_custom_call.1} parent=11 // pred_check_branch
          %502 = sbr.rel (%p500) target = $region56
        $region55: #{tpu_custom_call.1} parent=11 // pred_region
          _
        $region56: #{tpu_custom_call.1} parent=11 // pred_fallthru
          _
        // Predicated region
        $region57: #{tpu_custom_call.1} parent=11 // pred_check
          %p503 = pneg %p310
        $region58: #{tpu_custom_call.1} parent=11 // pred_check_branch
          %505 = sbr.rel (%p503) target = $region60
        $region59: #{tpu_custom_call.1} parent=11 // pred_region
          _
        $region60: #{tpu_custom_call.1} parent=11 // pred_fallthru
          _
        // Predicated region
        $region61: #{tpu_custom_call.1} parent=11 // pred_check
          %p506 = pneg %p331
        $region62: #{tpu_custom_call.1} parent=11 // pred_check_branch
          %508 = sbr.rel (%p506) target = $region64
        $region63: #{tpu_custom_call.1} parent=11 // pred_region
          %s510 = ssub.s32 1024, 1024
          %511 = vsyncadd [#allocation15], %s510
          %s512 = sshll.u32 [#allocation14], 4
          %s513 = int_to_ptr.vmem [resolvable:$true] %s512
          %518 = dma.hbm_to_vmem [thread:$0]  %s13, 1024, %s513, [#allocation15], 128, 128, 8
        $region64: #{tpu_custom_call.1} parent=11 // pred_fallthru
          _
        // Predicated region
        $region65: #{tpu_custom_call.1} parent=11 // pred_check
          %p519 = pneg %p352
        $region66: #{tpu_custom_call.1} parent=11 // pred_check_branch
          %521 = sbr.rel (%p519) target = $region68
        $region67: #{tpu_custom_call.1} parent=11 // pred_region
          _
        $region68: #{tpu_custom_call.1} parent=11 // pred_fallthru
          _
        // Predicated region
        $region69: #{tpu_custom_call.1} parent=11 // pred_check
          %p522 = pneg %p373
        $region70: #{tpu_custom_call.1} parent=11 // pred_check_branch
          %524 = sbr.rel (%p522) target = $region72
        $region71: #{tpu_custom_call.1} parent=11 // pred_region
          %s526 = ssub.s32 256, 256
          %527 = vsyncadd [#allocation15], %s526
          %s528 = sshll.u32 [#allocation16], 4
          %s529 = int_to_ptr.vmem [resolvable:$true] %s528
          %534 = dma.hbm_to_vmem [thread:$0]  %s15, 256, %s529, [#allocation15], 128, 128, 8
        $region72: #{tpu_custom_call.1} parent=11 // pred_fallthru
          _
      $region12: #{tpu_custom_call.1} parent=5 // pred_fallthru
        _
      %p535 = scmp.lt.s32.totalorder %s32, 2
      // Predicated region
      $region73: #{tpu_custom_call.1} parent=5 // pred_check
        %p536 = pneg %p535
      $region74: #{tpu_custom_call.1} parent=5 // pred_check_branch
        %538 = sbr.rel (%p536) target = $region76
      $region75: #{tpu_custom_call.1} parent=5 // pred_region
        // Predicated region
        $region77: #{tpu_custom_call.1} parent=75 // pred_check
          %p539 = pneg %p52
        $region78: #{tpu_custom_call.1} parent=75 // pred_check_branch
          %541 = sbr.rel (%p539) target = $region80
        $region79: #{tpu_custom_call.1} parent=75 // pred_region
          %s542 = sand.u32 %s42, 1
          %s543 = scalar_lea.sflag [#allocation3], %s542
          %s544 = sand.u32 %s42, 1
          %s545 = smul.addr %s544, 32
          %s546 = scalar_lea.vmem [#allocation2], %s545
          %s547 = smul.u32 2, %s32
          %s549 = ssub.s32 512, 512
          %550 = vsyncadd %s543, %s549
          %s551 = smul.addr %s547, 2
          %s552 = smul.addr %s551, 128
          %s553 = scalar_lea.hbm %s0, %s552
          %s554 = sshll.u32 %s546, 4
          %s555 = int_to_ptr.vmem [resolvable:$true] %s554
          %560 = dma.hbm_to_vmem [thread:$0]  %s553, 512, %s555, %s543, 128, 128, 8
        $region80: #{tpu_custom_call.1} parent=75 // pred_fallthru
          _
      $region76: #{tpu_custom_call.1} parent=5 // pred_fallthru
        _
      %p561 = scmp.le.s32.totalorder 1, %s32
      %p562 = scmp.lt.s32.totalorder %s32, 3
      %p563 = pnand %p561, %p562
      %p564 = pneg %p563
      // Predicated region
      $region81: #{tpu_custom_call.1} parent=5 // pred_check
        _
      $region82: #{tpu_custom_call.1} parent=5 // pred_check_branch
        %566 = sbr.rel (%p563) target = $region84
      $region83: #{tpu_custom_call.1} parent=5 // pred_region
        %s567 = ssub.s32 %s32, 1
        %s568 = sand.u32 %s45, 1
        %s569 = scalar_lea.sflag [#allocation3], %s568
        %s570 = sand.u32 %s45, 1
        %s571 = smul.addr %s570, 32
        %s572 = scalar_lea.vmem [#allocation2], %s571
        // Predicated region
        $region85: #{tpu_custom_call.1} parent=83 // pred_check
          %p573 = pneg %p58
        $region86: #{tpu_custom_call.1} parent=83 // pred_check_branch
          %575 = sbr.rel (%p573) target = $region88
        $region87: #{tpu_custom_call.1} parent=83 // pred_region
          %576 = dma.done %s569, 512
        $region88: #{tpu_custom_call.1} parent=83 // pred_fallthru
          _
        // Predicated region
        $region89: #{tpu_custom_call.1} parent=83 // pred_check
          %p577 = pneg %p79
        $region90: #{tpu_custom_call.1} parent=83 // pred_check_branch
          %579 = sbr.rel (%p577) target = $region92
        $region91: #{tpu_custom_call.1} parent=83 // pred_region
          %580 = dma.done [#allocation6], 128
        $region92: #{tpu_custom_call.1} parent=83 // pred_fallthru
          _
        // Predicated region
        $region93: #{tpu_custom_call.1} parent=83 // pred_check
          %p581 = pneg %p100
        $region94: #{tpu_custom_call.1} parent=83 // pred_check_branch
          %583 = sbr.rel (%p581) target = $region96
        $region95: #{tpu_custom_call.1} parent=83 // pred_region
          %584 = dma.done [#allocation6], 128
        $region96: #{tpu_custom_call.1} parent=83 // pred_fallthru
          _
        // Predicated region
        $region97: #{tpu_custom_call.1} parent=83 // pred_check
          %p585 = pneg %p142
        $region98: #{tpu_custom_call.1} parent=83 // pred_check_branch
          %587 = sbr.rel (%p585) target = $region100
        $region99: #{tpu_custom_call.1} parent=83 // pred_region
          %588 = dma.done [#allocation9], 1024
        $region100: #{tpu_custom_call.1} parent=83 // pred_fallthru
          _
        // Predicated region
        $region101: #{tpu_custom_call.1} parent=83 // pred_check
          %p589 = pneg %p163
        $region102: #{tpu_custom_call.1} parent=83 // pred_check_branch
          %591 = sbr.rel (%p589) target = $region104
        $region103: #{tpu_custom_call.1} parent=83 // pred_region
          %592 = dma.done [#allocation9], 1024
        $region104: #{tpu_custom_call.1} parent=83 // pred_fallthru
          _
        // Predicated region
        $region105: #{tpu_custom_call.1} parent=83 // pred_check
          %p593 = pneg %p226
        $region106: #{tpu_custom_call.1} parent=83 // pred_check_branch
          %595 = sbr.rel (%p593) target = $region108
        $region107: #{tpu_custom_call.1} parent=83 // pred_region
          %596 = dma.done [#allocation12], 1024
        $region108: #{tpu_custom_call.1} parent=83 // pred_fallthru
          _
        // Predicated region
        $region109: #{tpu_custom_call.1} parent=83 // pred_check
          %p597 = pneg %p247
        $region110: #{tpu_custom_call.1} parent=83 // pred_check_branch
          %599 = sbr.rel (%p597) target = $region112
        $region111: #{tpu_custom_call.1} parent=83 // pred_region
          %600 = dma.done [#allocation12], 1024
        $region112: #{tpu_custom_call.1} parent=83 // pred_fallthru
          _
        // Predicated region
        $region113: #{tpu_custom_call.1} parent=83 // pred_check
          %p601 = pneg %p331
        $region114: #{tpu_custom_call.1} parent=83 // pred_check_branch
          %603 = sbr.rel (%p601) target = $region116
        $region115: #{tpu_custom_call.1} parent=83 // pred_region
          %604 = dma.done [#allocation15], 1024
        $region116: #{tpu_custom_call.1} parent=83 // pred_fallthru
          _
        // Predicated region
        $region117: #{tpu_custom_call.1} parent=83 // pred_check
          %p605 = pneg %p373
        $region118: #{tpu_custom_call.1} parent=83 // pred_check_branch
          %607 = sbr.rel (%p605) target = $region120
        $region119: #{tpu_custom_call.1} parent=83 // pred_region
          %608 = dma.done [#allocation15], 256
        $region120: #{tpu_custom_call.1} parent=83 // pred_fallthru
          _
        %s609 = sand.u32 %s45, 1
        %s610 = scalar_lea.sflag [#allocation3], %s609
        %s611 = sand.u32 %s45, 1
        %s612 = smul.addr %s611, 32
        %s613 = scalar_lea.vmem [#allocation2], %s612
        %p614 = pneg %p58
        %p615 = pneg %p55
        %p616 = pneg %p79
        %p617 = pneg %p76
        %p618 = pneg %p100
        %p619 = pneg %p97
        %p620 = pneg %p121
        %p621 = pneg %p118
        %p622 = pneg %p142
        %p623 = pneg %p139
        %p624 = pneg %p163
        %p625 = pneg %p160
        %p626 = pneg %p184
        %p627 = pneg %p181
        %p628 = pneg %p205
        %p629 = pneg %p202
        %p630 = pneg %p226
        %p631 = pneg %p223
        %p632 = pneg %p247
        %p633 = pneg %p244
        %p634 = pneg %p268
        %p635 = pneg %p265
        %p636 = pneg %p289
        %p637 = pneg %p286
        %p638 = pneg %p310
        %p639 = pneg %p307
        %p640 = pneg %p331
        %p641 = pneg %p328
        %p642 = pneg %p352
        %p643 = pneg %p349
        %p644 = pneg %p373
        %p645 = pneg %p370
        %p646 = pneg %p399
        %p647 = pneg %p396
        %s648 = sand.u32 %s386, 1
        %s649 = scalar_lea.sflag [#allocation4], %s648
        %s650 = sand.u32 %s386, 1
        %s651 = smul.addr %s650, 32
        %s652 = scalar_lea.vmem [#allocation17], %s651
        %s653 = smul.u32 2, %s37
        %s654 = smul.u32 2, %s37
        %v655 = vld [vmem:[#allocation5] sm:$0xff]
        %v656 = vld [vmem:[%s572] sm:$0xff]
        %v657 = vld [vmem:[%s572 + $0x8] sm:$0xff]
        %v658 = vld [vmem:[%s572 + $0x10] sm:$0xff]
        %v659 = vld [vmem:[%s572 + $0x18] sm:$0xff]
        %v660 = vld [vmem:[#allocation7] sm:$0xff]
        %vm661 = vcmask 130048
        %v663 = vsel %vm661, %v655, 0
        %665 = vmatprep.subr.mxu0 0.0
        %666 = vmatpush1.msra.mxu0 %v656
        %667 = vmatprep.subr.mxu0 0.0
        %668 = vmatpush1.msra.mxu0 %v657
        %669 = vmatprep.subr.mxu0 0.0
        %670 = vmatpush1.msra.mxu0 0.0
        %671 = vmatprep.subr.mxu0 0.0
        %672 = vmatpush1.msra.mxu0 0.0
        %673 = vmatprep.subr.mxu0 0.0
        %674 = vmatpush1.msra.mxu0 0.0
        %675 = vmatprep.subr.mxu0 0.0
        %676 = vmatpush1.msra.mxu0 0.0
        %677 = vmatprep.subr.mxu0 0.0
        %678 = vmatpush1.msra.mxu0 0.0
        %679 = vmatprep.subr.mxu0 0.0
        %680 = vmatpush1.msra.mxu0 0.0
        %681 = vmatprep.subr.mxu0 0.0
        %682 = vmatpush1.msra.mxu0 0.0
        %683 = vmatprep.subr.mxu0 0.0
        %684 = vmatpush1.msra.mxu0 0.0
        %685 = vmatprep.subr.mxu0 0.0
        %686 = vmatpush1.msra.mxu0 0.0
        %687 = vmatprep.subr.mxu0 0.0
        %688 = vmatpush1.msra.mxu0 0.0
        %689 = vmatprep.subr.mxu0 0.0
        %690 = vmatpush1.msra.mxu0 0.0
        %691 = vmatprep.subr.mxu0 0.0
        %692 = vmatpush1.msra.mxu0 0.0
        %693 = vmatprep.subr.mxu0 0.0
        %694 = vmatpush1.msra.mxu0 0.0
        %695 = vmatprep.subr.mxu0 0.0
        %696 = vmatpush1.msra.mxu0 0.0
        %697 = vmatprep.subr.mxu0 0.0
        %698 = vmatpush1.msra.mxu0 0.0
        %699 = vmatprep.subr.mxu0 0.0
        %700 = vmatpush1.msra.mxu0 0.0
        %701 = vmatprep.subr.mxu0 0.0
        %702 = vmatpush1.msra.mxu0 0.0
        %703 = vmatprep.subr.mxu0 0.0
        %704 = vmatpush1.msra.mxu0 0.0
        %705 = vmatprep.subr.mxu0 0.0
        %706 = vmatpush1.msra.mxu0 0.0
        %707 = vmatprep.subr.mxu0 0.0
        %708 = vmatpush1.msra.mxu0 0.0
        %709 = vmatprep.subr.mxu0 0.0
        %710 = vmatpush1.msra.mxu0 0.0
        %711 = vmatprep.subr.mxu0 0.0
        %712 = vmatpush1.msra.mxu0 0.0
        %713 = vmatprep.subr.mxu0 0.0
        %714 = vmatpush1.msra.mxu0 0.0
        %715 = vmatprep.subr.mxu0 0.0
        %716 = vmatpush1.msra.mxu0 0.0
        %717 = vmatprep.subr.mxu0 0.0
        %718 = vmatpush1.msra.mxu0 0.0
        %719 = vmatprep.subr.mxu0 0.0
        %720 = vmatpush1.msra.mxu0 0.0
        %721 = vmatprep.subr.mxu0 0.0
        %722 = vmatpush1.msra.mxu0 0.0
        %723 = vmatprep.subr.mxu0 0.0
        %724 = vmatpush1.msra.mxu0 0.0
        %725 = vmatprep.subr.mxu0 0.0
        %726 = vmatpush1.msra.mxu0 0.0
        %727 = vmatprep.subr.mxu0 0.0
        %728 = vmatpush1.msra.mxu0 0.0
        %729 = vmatprep.mubr.f32.mxu0 0.0
        %730 = vmatmul.mubr.f32.gmra.mrb[0].mxu0 %v663
        %v731 = vpop.f32.mrb[0].mxu0
        %v732 = vadd.f32 %v660, %v731
        %v733 = vpop.f32.mrb[0].mxu0
        %734 = vdwg.mxu0
        %735 = vmatprep.subr.mxu0 0.0
        %736 = vmatpush1.msra.mxu0 %v658
        %737 = vmatprep.subr.mxu0 0.0
        %738 = vmatpush1.msra.mxu0 %v659
        %739 = vmatprep.subr.mxu0 0.0
        %740 = vmatpush1.msra.mxu0 0.0
        %741 = vmatprep.subr.mxu0 0.0
        %742 = vmatpush1.msra.mxu0 0.0
        %743 = vmatprep.subr.mxu0 0.0
        %744 = vmatpush1.msra.mxu0 0.0
        %745 = vmatprep.subr.mxu0 0.0
        %746 = vmatpush1.msra.mxu0 0.0
        %747 = vmatprep.subr.mxu0 0.0
        %748 = vmatpush1.msra.mxu0 0.0
        %749 = vmatprep.subr.mxu0 0.0
        %750 = vmatpush1.msra.mxu0 0.0
        %751 = vmatprep.subr.mxu0 0.0
        %752 = vmatpush1.msra.mxu0 0.0
        %753 = vmatprep.subr.mxu0 0.0
        %754 = vmatpush1.msra.mxu0 0.0
        %755 = vmatprep.subr.mxu0 0.0
        %756 = vmatpush1.msra.mxu0 0.0
        %757 = vmatprep.subr.mxu0 0.0
        %758 = vmatpush1.msra.mxu0 0.0
        %759 = vmatprep.subr.mxu0 0.0
        %760 = vmatpush1.msra.mxu0 0.0
        %761 = vmatprep.subr.mxu0 0.0
        %762 = vmatpush1.msra.mxu0 0.0
        %763 = vmatprep.subr.mxu0 0.0
        %764 = vmatpush1.msra.mxu0 0.0
        %765 = vmatprep.subr.mxu0 0.0
        %766 = vmatpush1.msra.mxu0 0.0
        %767 = vmatprep.subr.mxu0 0.0
        %768 = vmatpush1.msra.mxu0 0.0
        %769 = vmatprep.subr.mxu0 0.0
        %770 = vmatpush1.msra.mxu0 0.0
        %771 = vmatprep.subr.mxu0 0.0
        %772 = vmatpush1.msra.mxu0 0.0
        %773 = vmatprep.subr.mxu0 0.0
        %774 = vmatpush1.msra.mxu0 0.0
        %775 = vmatprep.subr.mxu0 0.0
        %776 = vmatpush1.msra.mxu0 0.0
        %777 = vmatprep.subr.mxu0 0.0
        %778 = vmatpush1.msra.mxu0 0.0
        %779 = vmatprep.subr.mxu0 0.0
        %780 = vmatpush1.msra.mxu0 0.0
        %781 = vmatprep.subr.mxu0 0.0
        %782 = vmatpush1.msra.mxu0 0.0
        %783 = vmatprep.subr.mxu0 0.0
        %784 = vmatpush1.msra.mxu0 0.0
        %785 = vmatprep.subr.mxu0 0.0
        %786 = vmatpush1.msra.mxu0 0.0
        %787 = vmatprep.subr.mxu0 0.0
        %788 = vmatpush1.msra.mxu0 0.0
        %789 = vmatprep.subr.mxu0 0.0
        %790 = vmatpush1.msra.mxu0 0.0
        %791 = vmatprep.subr.mxu0 0.0
        %792 = vmatpush1.msra.mxu0 0.0
        %793 = vmatprep.subr.mxu0 0.0
        %794 = vmatpush1.msra.mxu0 0.0
        %795 = vmatprep.subr.mxu0 0.0
        %796 = vmatpush1.msra.mxu0 0.0
        %797 = vmatprep.subr.mxu0 0.0
        %798 = vmatpush1.msra.mxu0 0.0
        %799 = vmatprep.mubr.f32.mxu0 0.0
        %800 = vmatmul.mubr.f32.gmra.mrb[0].mxu0 %v663
        %v801 = vpop.f32.mrb[0].mxu0
        %v802 = vadd.f32 %v660, %v801
        %v803 = vpop.f32.mrb[0].mxu0
        %804 = vdwg.mxu0
        %v805 = vld [vmem:[%s3] sm:$0xff]
        %v806 = vld [vmem:[%s3 + $0x8] sm:$0xff]
        %v807 = vld [vmem:[%s3 + $0x10] sm:$0xff]
        %v808 = vld [vmem:[%s3 + $0x18] sm:$0xff]
        %v809 = vld [vmem:[%s3 + $0x20] sm:$0xff]
        %v810 = vld [vmem:[%s3 + $0x28] sm:$0xff]
        %v811 = vld [vmem:[%s3 + $0x30] sm:$0xff]
        %v812 = vld [vmem:[%s3 + $0x38] sm:$0xff]
        %v813 = vld [vmem:[%s3 + $0x40] sm:$0xff]
        %v814 = vld [vmem:[%s3 + $0x48] sm:$0xff]
        %v815 = vld [vmem:[%s3 + $0x50] sm:$0xff]
        %v816 = vld [vmem:[%s3 + $0x58] sm:$0xff]
        %v817 = vld [vmem:[%s3 + $0x60] sm:$0xff]
        %v818 = vld [vmem:[%s3 + $0x68] sm:$0xff]
        %v819 = vld [vmem:[%s3 + $0x70] sm:$0xff]
        %v820 = vld [vmem:[%s3 + $0x78] sm:$0xff]
        loop: start=0, step=1, limit=8
        $region121: #{tpu_custom_call.1} parent=83 // loop_pre_header
          _
        $region122: #{tpu_custom_call.1} parent=83 // loop_header
          %s822 = sphi 0, %s826
          %p823 = scmp.ge.s32.totalorder %s822, 8
          %v827 = vphi %v732, %v2331
          %v828 = vphi %v802, %v2332
        $region123: #{tpu_custom_call.1} parent=83 // loop_header_branch
          %825 = sbr.rel (%p823) target = $region127
        $region124: #{tpu_custom_call.1} parent=83 // loop_body
          %s829 = smul.u32 %s822, 8
          %s830 = scalar_lea.vmem [#allocation8], %s829
          %v831 = vld [vmem:[%s830] sm:$0xff]
          %s832 = scalar_lea.vmem [#allocation10], %s829
          %v833 = vld [vmem:[%s832] sm:$0xff]
          %v834 = vrot.slane %v827, 4
          %v835 = vadd.f32 %v827, %v834
          %v836 = vrot.slane %v835, 2
          %v837 = vadd.f32 %v835, %v836
          %v838 = vrot.slane %v837, 1
          %v839 = vadd.f32 %v837, %v838
          %v840 = vrot.slane %v828, 4
          %v841 = vadd.f32 %v828, %v840
          %v842 = vrot.slane %v841, 2
          %v843 = vadd.f32 %v841, %v842
          %v844 = vrot.slane %v843, 1
          %v845 = vadd.f32 %v843, %v844
          %v846 = vrcp.pop 8.0
          %v847 = vmul.f32 %v839, %v846
          %v848 = vmul.f32 %v845, %v846
          %v849 = vsub.f32 %v827, %v847
          %v850 = vsub.f32 %v828, %v848
          %v851 = vmul.f32 %v849, %v849
          %v852 = vmul.f32 %v850, %v850
          %v853 = vrot.slane %v851, 4
          %v854 = vadd.f32 %v851, %v853
          %v855 = vrot.slane %v854, 2
          %v856 = vadd.f32 %v854, %v855
          %v857 = vrot.slane %v856, 1
          %v858 = vadd.f32 %v856, %v857
          %v859 = vrot.slane %v852, 4
          %v860 = vadd.f32 %v852, %v859
          %v861 = vrot.slane %v860, 2
          %v862 = vadd.f32 %v860, %v861
          %v863 = vrot.slane %v862, 1
          %v864 = vadd.f32 %v862, %v863
          %v865 = vmul.f32 %v858, %v846
          %v866 = vmul.f32 %v864, %v846
          %v867 = vadd.f32 %v865, 1e-05
          %v868 = vadd.f32 %v866, 1e-05
          %v869 = vrsqrt.pop %v867
          %v870 = vrsqrt.pop %v868
          %v871 = vmul.f32 %v849, %v869
          %v872 = vmul.f32 %v850, %v870
          %v873 = vmul.f32 %v871, %v831
          %v874 = vmul.f32 %v872, %v831
          %v875 = vadd.f32 %v873, %v833
          %v876 = vadd.f32 %v874, %v833
          %s877 = smul.u32 %s822, 24
          %s878 = scalar_lea.vmem %s6, %s877
          %v879 = vld [vmem:[%s878] sm:$0xff]
          %v880 = vld [vmem:[%s878 + $0x8] sm:$0xff]
          %v881 = vld [vmem:[%s878 + $0x10] sm:$0xff]
          %s882 = scalar_lea.vmem %s7, %s877
          %v883 = vld [vmem:[%s882] sm:$0xff]
          %v884 = vld [vmem:[%s882 + $0x8] sm:$0xff]
          %v885 = vld [vmem:[%s882 + $0x10] sm:$0xff]
          %vm886 = vcmask 64512
          %v888 = vsel %vm886, %v879, 0
          %v891 = vsel %vm886, %v880, 0
          %v894 = vsel %vm886, %v881, 0
          %896 = vmatprep.subr.mxu0 0.0
          %897 = vmatpush1.msra.mxu0 %v875
          %898 = vmatprep.subr.mxu0 0.0
          %899 = vmatpush1.msra.mxu0 0.0
          %900 = vmatprep.subr.mxu0 0.0
          %901 = vmatpush1.msra.mxu0 0.0
          %902 = vmatprep.subr.mxu0 0.0
          %903 = vmatpush1.msra.mxu0 0.0
          %904 = vmatprep.subr.mxu0 0.0
          %905 = vmatpush1.msra.mxu0 0.0
          %906 = vmatprep.subr.mxu0 0.0
          %907 = vmatpush1.msra.mxu0 0.0
          %908 = vmatprep.subr.mxu0 0.0
          %909 = vmatpush1.msra.mxu0 0.0
          %910 = vmatprep.subr.mxu0 0.0
          %911 = vmatpush1.msra.mxu0 0.0
          %912 = vmatprep.subr.mxu0 0.0
          %913 = vmatpush1.msra.mxu0 0.0
          %914 = vmatprep.subr.mxu0 0.0
          %915 = vmatpush1.msra.mxu0 0.0
          %916 = vmatprep.subr.mxu0 0.0
          %917 = vmatpush1.msra.mxu0 0.0
          %918 = vmatprep.subr.mxu0 0.0
          %919 = vmatpush1.msra.mxu0 0.0
          %920 = vmatprep.subr.mxu0 0.0
          %921 = vmatpush1.msra.mxu0 0.0
          %922 = vmatprep.subr.mxu0 0.0
          %923 = vmatpush1.msra.mxu0 0.0
          %924 = vmatprep.subr.mxu0 0.0
          %925 = vmatpush1.msra.mxu0 0.0
          %926 = vmatprep.subr.mxu0 0.0
          %927 = vmatpush1.msra.mxu0 0.0
          %928 = vmatprep.subr.mxu0 0.0
          %929 = vmatpush1.msra.mxu0 0.0
          %930 = vmatprep.subr.mxu0 0.0
          %931 = vmatpush1.msra.mxu0 0.0
          %932 = vmatprep.subr.mxu0 0.0
          %933 = vmatpush1.msra.mxu0 0.0
          %934 = vmatprep.subr.mxu0 0.0
          %935 = vmatpush1.msra.mxu0 0.0
          %936 = vmatprep.subr.mxu0 0.0
          %937 = vmatpush1.msra.mxu0 0.0
          %938 = vmatprep.subr.mxu0 0.0
          %939 = vmatpush1.msra.mxu0 0.0
          %940 = vmatprep.subr.mxu0 0.0
          %941 = vmatpush1.msra.mxu0 0.0
          %942 = vmatprep.subr.mxu0 0.0
          %943 = vmatpush1.msra.mxu0 0.0
          %944 = vmatprep.subr.mxu0 0.0
          %945 = vmatpush1.msra.mxu0 0.0
          %946 = vmatprep.subr.mxu0 0.0
          %947 = vmatpush1.msra.mxu0 0.0
          %948 = vmatprep.subr.mxu0 0.0
          %949 = vmatpush1.msra.mxu0 0.0
          %950 = vmatprep.subr.mxu0 0.0
          %951 = vmatpush1.msra.mxu0 0.0
          %952 = vmatprep.subr.mxu0 0.0
          %953 = vmatpush1.msra.mxu0 0.0
          %954 = vmatprep.subr.mxu0 0.0
          %955 = vmatpush1.msra.mxu0 0.0
          %956 = vmatprep.subr.mxu0 0.0
          %957 = vmatpush1.msra.mxu0 0.0
          %958 = vmatprep.subr.mxu0 0.0
          %959 = vmatpush1.msra.mxu0 0.0
          %960 = vmatprep.mubr.f32.mxu0 0.0
          %961 = vmatmul.mubr.f32.gmra.mrb[0].mxu0 %v888
          %v962 = vpop.f32.mrb[0].mxu0
          %v963 = vadd.f32 %v883, %v962
          %v964 = vpop.f32.mrb[0].mxu0
          %965 = vmatprep.mubr.f32.mxu0 0.0
          %966 = vmatmul.mubr.f32.gmra.mrb[0].mxu0 %v891
          %v967 = vpop.f32.mrb[0].mxu0
          %v968 = vadd.f32 %v884, %v967
          %v969 = vpop.f32.mrb[0].mxu0
          %970 = vmatprep.mubr.f32.mxu0 0.0
          %971 = vmatmul.mubr.f32.gmra.mrb[0].mxu0 %v894
          %v972 = vpop.f32.mrb[0].mxu0
          %v973 = vadd.f32 %v885, %v972
          %v974 = vpop.f32.mrb[0].mxu0
          %975 = vdwg.mxu0
          %976 = vmatprep.subr.mxu0 0.0
          %977 = vmatpush1.msra.mxu0 %v876
          %978 = vmatprep.subr.mxu0 0.0
          %979 = vmatpush1.msra.mxu0 0.0
          %980 = vmatprep.subr.mxu0 0.0
          %981 = vmatpush1.msra.mxu0 0.0
          %982 = vmatprep.subr.mxu0 0.0
          %983 = vmatpush1.msra.mxu0 0.0
          %984 = vmatprep.subr.mxu0 0.0
          %985 = vmatpush1.msra.mxu0 0.0
          %986 = vmatprep.subr.mxu0 0.0
          %987 = vmatpush1.msra.mxu0 0.0
          %988 = vmatprep.subr.mxu0 0.0
          %989 = vmatpush1.msra.mxu0 0.0
          %990 = vmatprep.subr.mxu0 0.0
          %991 = vmatpush1.msra.mxu0 0.0
          %992 = vmatprep.subr.mxu0 0.0
          %993 = vmatpush1.msra.mxu0 0.0
          %994 = vmatprep.subr.mxu0 0.0
          %995 = vmatpush1.msra.mxu0 0.0
          %996 = vmatprep.subr.mxu0 0.0
          %997 = vmatpush1.msra.mxu0 0.0
          %998 = vmatprep.subr.mxu0 0.0
          %999 = vmatpush1.msra.mxu0 0.0
          %1000 = vmatprep.subr.mxu0 0.0
          %1001 = vmatpush1.msra.mxu0 0.0
          %1002 = vmatprep.subr.mxu0 0.0
          %1003 = vmatpush1.msra.mxu0 0.0
          %1004 = vmatprep.subr.mxu0 0.0
          %1005 = vmatpush1.msra.mxu0 0.0
          %1006 = vmatprep.subr.mxu0 0.0
          %1007 = vmatpush1.msra.mxu0 0.0
          %1008 = vmatprep.subr.mxu0 0.0
          %1009 = vmatpush1.msra.mxu0 0.0
          %1010 = vmatprep.subr.mxu0 0.0
          %1011 = vmatpush1.msra.mxu0 0.0
          %1012 = vmatprep.subr.mxu0 0.0
          %1013 = vmatpush1.msra.mxu0 0.0
          %1014 = vmatprep.subr.mxu0 0.0
          %1015 = vmatpush1.msra.mxu0 0.0
          %1016 = vmatprep.subr.mxu0 0.0
          %1017 = vmatpush1.msra.mxu0 0.0
          %1018 = vmatprep.subr.mxu0 0.0
          %1019 = vmatpush1.msra.mxu0 0.0
          %1020 = vmatprep.subr.mxu0 0.0
          %1021 = vmatpush1.msra.mxu0 0.0
          %1022 = vmatprep.subr.mxu0 0.0
          %1023 = vmatpush1.msra.mxu0 0.0
          %1024 = vmatprep.subr.mxu0 0.0
          %1025 = vmatpush1.msra.mxu0 0.0
          %1026 = vmatprep.subr.mxu0 0.0
          %1027 = vmatpush1.msra.mxu0 0.0
          %1028 = vmatprep.subr.mxu0 0.0
          %1029 = vmatpush1.msra.mxu0 0.0
          %1030 = vmatprep.subr.mxu0 0.0
          %1031 = vmatpush1.msra.mxu0 0.0
          %1032 = vmatprep.subr.mxu0 0.0
          %1033 = vmatpush1.msra.mxu0 0.0
          %1034 = vmatprep.subr.mxu0 0.0
          %1035 = vmatpush1.msra.mxu0 0.0
          %1036 = vmatprep.subr.mxu0 0.0
          %1037 = vmatpush1.msra.mxu0 0.0
          %1038 = vmatprep.subr.mxu0 0.0
          %1039 = vmatpush1.msra.mxu0 0.0
          %1040 = vmatprep.mubr.f32.mxu0 0.0
          %1041 = vmatmul.mubr.f32.gmra.mrb[0].mxu0 %v888
          %v1042 = vpop.f32.mrb[0].mxu0
          %v1043 = vadd.f32 %v883, %v1042
          %v1044 = vpop.f32.mrb[0].mxu0
          %1045 = vmatprep.mubr.f32.mxu0 0.0
          %1046 = vmatmul.mubr.f32.gmra.mrb[0].mxu0 %v891
          %v1047 = vpop.f32.mrb[0].mxu0
          %v1048 = vadd.f32 %v884, %v1047
          %v1049 = vpop.f32.mrb[0].mxu0
          %1050 = vmatprep.mubr.f32.mxu0 0.0
          %1051 = vmatmul.mubr.f32.gmra.mrb[0].mxu0 %v894
          %v1052 = vpop.f32.mrb[0].mxu0
          %v1053 = vadd.f32 %v885, %v1052
          %v1054 = vpop.f32.mrb[0].mxu0
          %1055 = vdwg.mxu0
          %1056 = vxpose.xlu0.b32.start [1/16] %v963, 128
          %1057 = vxpose.xlu0.b32.cont [2/16] 0.0, 128
          %1058 = vxpose.xlu0.b32.cont [3/16] 0.0, 128
          %1059 = vxpose.xlu0.b32.cont [4/16] 0.0, 128
          %1060 = vxpose.xlu0.b32.cont [5/16] 0.0, 128
          %1061 = vxpose.xlu0.b32.cont [6/16] 0.0, 128
          %1062 = vxpose.xlu0.b32.cont [7/16] 0.0, 128
          %1063 = vxpose.xlu0.b32.cont [8/16] 0.0, 128
          %1064 = vxpose.xlu0.b32.cont [9/16] 0.0, 128
          %1065 = vxpose.xlu0.b32.cont [10/16] 0.0, 128
          %1066 = vxpose.xlu0.b32.cont [11/16] 0.0, 128
          %1067 = vxpose.xlu0.b32.cont [12/16] 0.0, 128
          %1068 = vxpose.xlu0.b32.cont [13/16] 0.0, 128
          %1069 = vxpose.xlu0.b32.cont [14/16] 0.0, 128
          %1070 = vxpose.xlu0.b32.cont [15/16] 0.0, 128
          %1071 = vxpose.xlu0.b32.end [16/16] 0.0, 128
          %v1072 = vpop.trf.xlu0
          %v1073 = vpop.trf.xlu0
          %v1074 = vpop.trf.xlu0
          %v1075 = vpop.trf.xlu0
          %v1076 = vpop.trf.xlu0
          %v1077 = vpop.trf.xlu0
          %v1078 = vpop.trf.xlu0
          %v1079 = vpop.trf.xlu0
          %v1080 = vpop.trf.xlu0
          %v1081 = vpop.trf.xlu0
          %v1082 = vpop.trf.xlu0
          %v1083 = vpop.trf.xlu0
          %v1084 = vpop.trf.xlu0
          %v1085 = vpop.trf.xlu0
          %v1086 = vpop.trf.xlu0
          %v1087 = vpop.trf.xlu0
          %1088 = vxpose.xlu0.b32.start [1/16] %v1043, 128
          %1089 = vxpose.xlu0.b32.cont [2/16] 0.0, 128
          %1090 = vxpose.xlu0.b32.cont [3/16] 0.0, 128
          %1091 = vxpose.xlu0.b32.cont [4/16] 0.0, 128
          %1092 = vxpose.xlu0.b32.cont [5/16] 0.0, 128
          %1093 = vxpose.xlu0.b32.cont [6/16] 0.0, 128
          %1094 = vxpose.xlu0.b32.cont [7/16] 0.0, 128
          %1095 = vxpose.xlu0.b32.cont [8/16] 0.0, 128
          %1096 = vxpose.xlu0.b32.cont [9/16] 0.0, 128
          %1097 = vxpose.xlu0.b32.cont [10/16] 0.0, 128
          %1098 = vxpose.xlu0.b32.cont [11/16] 0.0, 128
          %1099 = vxpose.xlu0.b32.cont [12/16] 0.0, 128
          %1100 = vxpose.xlu0.b32.cont [13/16] 0.0, 128
          %1101 = vxpose.xlu0.b32.cont [14/16] 0.0, 128
          %1102 = vxpose.xlu0.b32.cont [15/16] 0.0, 128
          %1103 = vxpose.xlu0.b32.end [16/16] 0.0, 128
          %v1104 = vpop.trf.xlu0
          %v1105 = vpop.trf.xlu0
          %v1106 = vpop.trf.xlu0
          %v1107 = vpop.trf.xlu0
          %v1108 = vpop.trf.xlu0
          %v1109 = vpop.trf.xlu0
          %v1110 = vpop.trf.xlu0
          %v1111 = vpop.trf.xlu0
          %v1112 = vpop.trf.xlu0
          %v1113 = vpop.trf.xlu0
          %v1114 = vpop.trf.xlu0
          %v1115 = vpop.trf.xlu0
          %v1116 = vpop.trf.xlu0
          %v1117 = vpop.trf.xlu0
          %v1118 = vpop.trf.xlu0
          %v1119 = vpop.trf.xlu0
          %v1121 = vsel %vm886, %v1072, 0
          %v1124 = vsel %vm886, %v1073, 0
          %v1127 = vsel %vm886, %v1074, 0
          %v1130 = vsel %vm886, %v1075, 0
          %v1133 = vsel %vm886, %v1076, 0
          %v1136 = vsel %vm886, %v1077, 0
          %v1139 = vsel %vm886, %v1078, 0
          %v1142 = vsel %vm886, %v1079, 0
          %v1145 = vsel %vm886, %v1080, 0
          %v1148 = vsel %vm886, %v1081, 0
          %v1151 = vsel %vm886, %v1082, 0
          %v1154 = vsel %vm886, %v1083, 0
          %v1157 = vsel %vm886, %v1084, 0
          %v1160 = vsel %vm886, %v1085, 0
          %v1163 = vsel %vm886, %v1086, 0
          %v1166 = vsel %vm886, %v1087, 0
          %1168 = vmatprep.subr.mxu0 0.0
          %1169 = vmatpush1.msra.mxu0 %v968
          %1170 = vmatprep.subr.mxu0 0.0
          %1171 = vmatpush1.msra.mxu0 0.0
          %1172 = vmatprep.subr.mxu0 0.0
          %1173 = vmatpush1.msra.mxu0 0.0
          %1174 = vmatprep.subr.mxu0 0.0
          %1175 = vmatpush1.msra.mxu0 0.0
          %1176 = vmatprep.subr.mxu0 0.0
          %1177 = vmatpush1.msra.mxu0 0.0
          %1178 = vmatprep.subr.mxu0 0.0
          %1179 = vmatpush1.msra.mxu0 0.0
          %1180 = vmatprep.subr.mxu0 0.0
          %1181 = vmatpush1.msra.mxu0 0.0
          %1182 = vmatprep.subr.mxu0 0.0
          %1183 = vmatpush1.msra.mxu0 0.0
          %1184 = vmatprep.subr.mxu0 0.0
          %1185 = vmatpush1.msra.mxu0 0.0
          %1186 = vmatprep.subr.mxu0 0.0
          %1187 = vmatpush1.msra.mxu0 0.0
          %1188 = vmatprep.subr.mxu0 0.0
          %1189 = vmatpush1.msra.mxu0 0.0
          %1190 = vmatprep.subr.mxu0 0.0
          %1191 = vmatpush1.msra.mxu0 0.0
          %1192 = vmatprep.subr.mxu0 0.0
          %1193 = vmatpush1.msra.mxu0 0.0
          %1194 = vmatprep.subr.mxu0 0.0
          %1195 = vmatpush1.msra.mxu0 0.0
          %1196 = vmatprep.subr.mxu0 0.0
          %1197 = vmatpush1.msra.mxu0 0.0
          %1198 = vmatprep.subr.mxu0 0.0
          %1199 = vmatpush1.msra.mxu0 0.0
          %1200 = vmatprep.subr.mxu0 0.0
          %1201 = vmatpush1.msra.mxu0 0.0
          %1202 = vmatprep.subr.mxu0 0.0
          %1203 = vmatpush1.msra.mxu0 0.0
          %1204 = vmatprep.subr.mxu0 0.0
          %1205 = vmatpush1.msra.mxu0 0.0
          %1206 = vmatprep.subr.mxu0 0.0
          %1207 = vmatpush1.msra.mxu0 0.0
          %1208 = vmatprep.subr.mxu0 0.0
          %1209 = vmatpush1.msra.mxu0 0.0
          %1210 = vmatprep.subr.mxu0 0.0
          %1211 = vmatpush1.msra.mxu0 0.0
          %1212 = vmatprep.subr.mxu0 0.0
          %1213 = vmatpush1.msra.mxu0 0.0
          %1214 = vmatprep.subr.mxu0 0.0
          %1215 = vmatpush1.msra.mxu0 0.0
          %1216 = vmatprep.subr.mxu0 0.0
          %1217 = vmatpush1.msra.mxu0 0.0
          %1218 = vmatprep.subr.mxu0 0.0
          %1219 = vmatpush1.msra.mxu0 0.0
          %1220 = vmatprep.subr.mxu0 0.0
          %1221 = vmatpush1.msra.mxu0 0.0
          %1222 = vmatprep.subr.mxu0 0.0
          %1223 = vmatpush1.msra.mxu0 0.0
          %1224 = vmatprep.subr.mxu0 0.0
          %1225 = vmatpush1.msra.mxu0 0.0
          %1226 = vmatprep.subr.mxu0 0.0
          %1227 = vmatpush1.msra.mxu0 0.0
          %1228 = vmatprep.subr.mxu0 0.0
          %1229 = vmatpush1.msra.mxu0 0.0
          %1230 = vmatprep.subr.mxu0 0.0
          %1231 = vmatpush1.msra.mxu0 0.0
          %1232 = vmatprep.mubr.f32.mxu0 0.0
          %1233 = vmatmul.mubr.f32.gmra.mrb[0].mxu0 %v1121
          %v1234 = vpop.f32.mrb[0].mxu0
          %v1235 = vadd.f32 %v805, %v1234
          %v1236 = vpop.f32.mrb[0].mxu0
          %1237 = vmatprep.mubr.f32.mxu0 0.0
          %1238 = vmatmul.mubr.f32.gmra.mrb[0].mxu0 %v1124
          %v1239 = vpop.f32.mrb[0].mxu0
          %v1240 = vadd.f32 %v806, %v1239
          %v1241 = vpop.f32.mrb[0].mxu0
          %1242 = vmatprep.mubr.f32.mxu0 0.0
          %1243 = vmatmul.mubr.f32.gmra.mrb[0].mxu0 %v1127
          %v1244 = vpop.f32.mrb[0].mxu0
          %v1245 = vadd.f32 %v807, %v1244
          %v1246 = vpop.f32.mrb[0].mxu0
          %1247 = vmatprep.mubr.f32.mxu0 0.0
          %1248 = vmatmul.mubr.f32.gmra.mrb[0].mxu0 %v1130
          %v1249 = vpop.f32.mrb[0].mxu0
          %v1250 = vadd.f32 %v808, %v1249
          %v1251 = vpop.f32.mrb[0].mxu0
          %1252 = vmatprep.mubr.f32.mxu0 0.0
          %1253 = vmatmul.mubr.f32.gmra.mrb[0].mxu0 %v1133
          %v1254 = vpop.f32.mrb[0].mxu0
          %v1255 = vadd.f32 %v809, %v1254
          %v1256 = vpop.f32.mrb[0].mxu0
          %1257 = vmatprep.mubr.f32.mxu0 0.0
          %1258 = vmatmul.mubr.f32.gmra.mrb[0].mxu0 %v1136
          %v1259 = vpop.f32.mrb[0].mxu0
          %v1260 = vadd.f32 %v810, %v1259
          %v1261 = vpop.f32.mrb[0].mxu0
          %1262 = vmatprep.mubr.f32.mxu0 0.0
          %1263 = vmatmul.mubr.f32.gmra.mrb[0].mxu0 %v1139
          %v1264 = vpop.f32.mrb[0].mxu0
          %v1265 = vadd.f32 %v811, %v1264
          %v1266 = vpop.f32.mrb[0].mxu0
          %1267 = vmatprep.mubr.f32.mxu0 0.0
          %1268 = vmatmul.mubr.f32.gmra.mrb[0].mxu0 %v1142
          %v1269 = vpop.f32.mrb[0].mxu0
          %v1270 = vadd.f32 %v812, %v1269
          %v1271 = vpop.f32.mrb[0].mxu0
          %1272 = vmatprep.mubr.f32.mxu0 0.0
          %1273 = vmatmul.mubr.f32.gmra.mrb[0].mxu0 %v1145
          %v1274 = vpop.f32.mrb[0].mxu0
          %v1275 = vadd.f32 %v813, %v1274
          %v1276 = vpop.f32.mrb[0].mxu0
          %1277 = vmatprep.mubr.f32.mxu0 0.0
          %1278 = vmatmul.mubr.f32.gmra.mrb[0].mxu0 %v1148
          %v1279 = vpop.f32.mrb[0].mxu0
          %v1280 = vadd.f32 %v814, %v1279
          %v1281 = vpop.f32.mrb[0].mxu0
          %1282 = vmatprep.mubr.f32.mxu0 0.0
          %1283 = vmatmul.mubr.f32.gmra.mrb[0].mxu0 %v1151
          %v1284 = vpop.f32.mrb[0].mxu0
          %v1285 = vadd.f32 %v815, %v1284
          %v1286 = vpop.f32.mrb[0].mxu0
          %1287 = vmatprep.mubr.f32.mxu0 0.0
          %1288 = vmatmul.mubr.f32.gmra.mrb[0].mxu0 %v1154
          %v1289 = vpop.f32.mrb[0].mxu0
          %v1290 = vadd.f32 %v816, %v1289
          %v1291 = vpop.f32.mrb[0].mxu0
          %1292 = vmatprep.mubr.f32.mxu0 0.0
          %1293 = vmatmul.mubr.f32.gmra.mrb[0].mxu0 %v1157
          %v1294 = vpop.f32.mrb[0].mxu0
          %v1295 = vadd.f32 %v817, %v1294
          %v1296 = vpop.f32.mrb[0].mxu0
          %1297 = vmatprep.mubr.f32.mxu0 0.0
          %1298 = vmatmul.mubr.f32.gmra.mrb[0].mxu0 %v1160
          %v1299 = vpop.f32.mrb[0].mxu0
          %v1300 = vadd.f32 %v818, %v1299
          %v1301 = vpop.f32.mrb[0].mxu0
          %1302 = vmatprep.mubr.f32.mxu0 0.0
          %1303 = vmatmul.mubr.f32.gmra.mrb[0].mxu0 %v1163
          %v1304 = vpop.f32.mrb[0].mxu0
          %v1305 = vadd.f32 %v819, %v1304
          %v1306 = vpop.f32.mrb[0].mxu0
          %1307 = vmatprep.mubr.f32.mxu0 0.0
          %1308 = vmatmul.mubr.f32.gmra.mrb[0].mxu0 %v1166
          %v1309 = vpop.f32.mrb[0].mxu0
          %v1310 = vadd.f32 %v820, %v1309
          %v1311 = vpop.f32.mrb[0].mxu0
          %1312 = vdwg.mxu0
          %v1314 = vsel %vm886, %v1104, 0
          %v1317 = vsel %vm886, %v1105, 0
          %v1320 = vsel %vm886, %v1106, 0
          %v1323 = vsel %vm886, %v1107, 0
          %v1326 = vsel %vm886, %v1108, 0
          %v1329 = vsel %vm886, %v1109, 0
          %v1332 = vsel %vm886, %v1110, 0
          %v1335 = vsel %vm886, %v1111, 0
          %v1338 = vsel %vm886, %v1112, 0
          %v1341 = vsel %vm886, %v1113, 0
          %v1344 = vsel %vm886, %v1114, 0
          %v1347 = vsel %vm886, %v1115, 0
          %v1350 = vsel %vm886, %v1116, 0
          %v1353 = vsel %vm886, %v1117, 0
          %v1356 = vsel %vm886, %v1118, 0
          %v1359 = vsel %vm886, %v1119, 0
          %1361 = vmatprep.subr.mxu0 0.0
          %1362 = vmatpush1.msra.mxu0 %v1048
          %1363 = vmatprep.subr.mxu0 0.0
          %1364 = vmatpush1.msra.mxu0 0.0
          %1365 = vmatprep.subr.mxu0 0.0
          %1366 = vmatpush1.msra.mxu0 0.0
          %1367 = vmatprep.subr.mxu0 0.0
          %1368 = vmatpush1.msra.mxu0 0.0
          %1369 = vmatprep.subr.mxu0 0.0
          %1370 = vmatpush1.msra.mxu0 0.0
          %1371 = vmatprep.subr.mxu0 0.0
          %1372 = vmatpush1.msra.mxu0 0.0
          %1373 = vmatprep.subr.mxu0 0.0
          %1374 = vmatpush1.msra.mxu0 0.0
          %1375 = vmatprep.subr.mxu0 0.0
          %1376 = vmatpush1.msra.mxu0 0.0
          %1377 = vmatprep.subr.mxu0 0.0
          %1378 = vmatpush1.msra.mxu0 0.0
          %1379 = vmatprep.subr.mxu0 0.0
          %1380 = vmatpush1.msra.mxu0 0.0
          %1381 = vmatprep.subr.mxu0 0.0
          %1382 = vmatpush1.msra.mxu0 0.0
          %1383 = vmatprep.subr.mxu0 0.0
          %1384 = vmatpush1.msra.mxu0 0.0
          %1385 = vmatprep.subr.mxu0 0.0
          %1386 = vmatpush1.msra.mxu0 0.0
          %1387 = vmatprep.subr.mxu0 0.0
          %1388 = vmatpush1.msra.mxu0 0.0
          %1389 = vmatprep.subr.mxu0 0.0
          %1390 = vmatpush1.msra.mxu0 0.0
          %1391 = vmatprep.subr.mxu0 0.0
          %1392 = vmatpush1.msra.mxu0 0.0
          %1393 = vmatprep.subr.mxu0 0.0
          %1394 = vmatpush1.msra.mxu0 0.0
          %1395 = vmatprep.subr.mxu0 0.0
          %1396 = vmatpush1.msra.mxu0 0.0
          %1397 = vmatprep.subr.mxu0 0.0
          %1398 = vmatpush1.msra.mxu0 0.0
          %1399 = vmatprep.subr.mxu0 0.0
          %1400 = vmatpush1.msra.mxu0 0.0
          %1401 = vmatprep.subr.mxu0 0.0
          %1402 = vmatpush1.msra.mxu0 0.0
          %1403 = vmatprep.subr.mxu0 0.0
          %1404 = vmatpush1.msra.mxu0 0.0
          %1405 = vmatprep.subr.mxu0 0.0
          %1406 = vmatpush1.msra.mxu0 0.0
          %1407 = vmatprep.subr.mxu0 0.0
          %1408 = vmatpush1.msra.mxu0 0.0
          %1409 = vmatprep.subr.mxu0 0.0
          %1410 = vmatpush1.msra.mxu0 0.0
          %1411 = vmatprep.subr.mxu0 0.0
          %1412 = vmatpush1.msra.mxu0 0.0
          %1413 = vmatprep.subr.mxu0 0.0
          %1414 = vmatpush1.msra.mxu0 0.0
          %1415 = vmatprep.subr.mxu0 0.0
          %1416 = vmatpush1.msra.mxu0 0.0
          %1417 = vmatprep.subr.mxu0 0.0
          %1418 = vmatpush1.msra.mxu0 0.0
          %1419 = vmatprep.subr.mxu0 0.0
          %1420 = vmatpush1.msra.mxu0 0.0
          %1421 = vmatprep.subr.mxu0 0.0
          %1422 = vmatpush1.msra.mxu0 0.0
          %1423 = vmatprep.subr.mxu0 0.0
          %1424 = vmatpush1.msra.mxu0 0.0
          %1425 = vmatprep.mubr.f32.mxu0 0.0
          %1426 = vmatmul.mubr.f32.gmra.mrb[0].mxu0 %v1314
          %v1427 = vpop.f32.mrb[0].mxu0
          %v1428 = vadd.f32 %v805, %v1427
          %v1429 = vpop.f32.mrb[0].mxu0
          %1430 = vmatprep.mubr.f32.mxu0 0.0
          %1431 = vmatmul.mubr.f32.gmra.mrb[0].mxu0 %v1317
          %v1432 = vpop.f32.mrb[0].mxu0
          %v1433 = vadd.f32 %v806, %v1432
          %v1434 = vpop.f32.mrb[0].mxu0
          %1435 = vmatprep.mubr.f32.mxu0 0.0
          %1436 = vmatmul.mubr.f32.gmra.mrb[0].mxu0 %v1320
          %v1437 = vpop.f32.mrb[0].mxu0
          %v1438 = vadd.f32 %v807, %v1437
          %v1439 = vpop.f32.mrb[0].mxu0
          %1440 = vmatprep.mubr.f32.mxu0 0.0
          %1441 = vmatmul.mubr.f32.gmra.mrb[0].mxu0 %v1323
          %v1442 = vpop.f32.mrb[0].mxu0
          %v1443 = vadd.f32 %v808, %v1442
          %v1444 = vpop.f32.mrb[0].mxu0
          %1445 = vmatprep.mubr.f32.mxu0 0.0
          %1446 = vmatmul.mubr.f32.gmra.mrb[0].mxu0 %v1326
          %v1447 = vpop.f32.mrb[0].mxu0
          %v1448 = vadd.f32 %v809, %v1447
          %v1449 = vpop.f32.mrb[0].mxu0
          %1450 = vmatprep.mubr.f32.mxu0 0.0
          %1451 = vmatmul.mubr.f32.gmra.mrb[0].mxu0 %v1329
          %v1452 = vpop.f32.mrb[0].mxu0
          %v1453 = vadd.f32 %v810, %v1452
          %v1454 = vpop.f32.mrb[0].mxu0
          %1455 = vmatprep.mubr.f32.mxu0 0.0
          %1456 = vmatmul.mubr.f32.gmra.mrb[0].mxu0 %v1332
          %v1457 = vpop.f32.mrb[0].mxu0
          %v1458 = vadd.f32 %v811, %v1457
          %v1459 = vpop.f32.mrb[0].mxu0
          %1460 = vmatprep.mubr.f32.mxu0 0.0
          %1461 = vmatmul.mubr.f32.gmra.mrb[0].mxu0 %v1335
          %v1462 = vpop.f32.mrb[0].mxu0
          %v1463 = vadd.f32 %v812, %v1462
          %v1464 = vpop.f32.mrb[0].mxu0
          %1465 = vmatprep.mubr.f32.mxu0 0.0
          %1466 = vmatmul.mubr.f32.gmra.mrb[0].mxu0 %v1338
          %v1467 = vpop.f32.mrb[0].mxu0
          %v1468 = vadd.f32 %v813, %v1467
          %v1469 = vpop.f32.mrb[0].mxu0
          %1470 = vmatprep.mubr.f32.mxu0 0.0
          %1471 = vmatmul.mubr.f32.gmra.mrb[0].mxu0 %v1341
          %v1472 = vpop.f32.mrb[0].mxu0
          %v1473 = vadd.f32 %v814, %v1472
          %v1474 = vpop.f32.mrb[0].mxu0
          %1475 = vmatprep.mubr.f32.mxu0 0.0
          %1476 = vmatmul.mubr.f32.gmra.mrb[0].mxu0 %v1344
          %v1477 = vpop.f32.mrb[0].mxu0
          %v1478 = vadd.f32 %v815, %v1477
          %v1479 = vpop.f32.mrb[0].mxu0
          %1480 = vmatprep.mubr.f32.mxu0 0.0
          %1481 = vmatmul.mubr.f32.gmra.mrb[0].mxu0 %v1347
          %v1482 = vpop.f32.mrb[0].mxu0
          %v1483 = vadd.f32 %v816, %v1482
          %v1484 = vpop.f32.mrb[0].mxu0
          %1485 = vmatprep.mubr.f32.mxu0 0.0
          %1486 = vmatmul.mubr.f32.gmra.mrb[0].mxu0 %v1350
          %v1487 = vpop.f32.mrb[0].mxu0
          %v1488 = vadd.f32 %v817, %v1487
          %v1489 = vpop.f32.mrb[0].mxu0
          %1490 = vmatprep.mubr.f32.mxu0 0.0
          %1491 = vmatmul.mubr.f32.gmra.mrb[0].mxu0 %v1353
          %v1492 = vpop.f32.mrb[0].mxu0
          %v1493 = vadd.f32 %v818, %v1492
          %v1494 = vpop.f32.mrb[0].mxu0
          %1495 = vmatprep.mubr.f32.mxu0 0.0
          %1496 = vmatmul.mubr.f32.gmra.mrb[0].mxu0 %v1356
          %v1497 = vpop.f32.mrb[0].mxu0
          %v1498 = vadd.f32 %v819, %v1497
          %v1499 = vpop.f32.mrb[0].mxu0
          %1500 = vmatprep.mubr.f32.mxu0 0.0
          %1501 = vmatmul.mubr.f32.gmra.mrb[0].mxu0 %v1359
          %v1502 = vpop.f32.mrb[0].mxu0
          %v1503 = vadd.f32 %v820, %v1502
          %v1504 = vpop.f32.mrb[0].mxu0
          %1505 = vdwg.mxu0
          %1506 = vmax.xlane.f32.xlu0 %v1235
          %v1507 = vpop.xlane.xlu0 %1506
          %1508 = vmax.xlane.f32.xlu0 %v1240
          %v1509 = vpop.xlane.xlu0 %1508
          %1510 = vmax.xlane.f32.xlu0 %v1245
          %v1511 = vpop.xlane.xlu0 %1510
          %1512 = vmax.xlane.f32.xlu0 %v1250
          %v1513 = vpop.xlane.xlu0 %1512
          %1514 = vmax.xlane.f32.xlu0 %v1255
          %v1515 = vpop.xlane.xlu0 %1514
          %1516 = vmax.xlane.f32.xlu0 %v1260
          %v1517 = vpop.xlane.xlu0 %1516
          %1518 = vmax.xlane.f32.xlu0 %v1265
          %v1519 = vpop.xlane.xlu0 %1518
          %1520 = vmax.xlane.f32.xlu0 %v1270
          %v1521 = vpop.xlane.xlu0 %1520
          %1522 = vmax.xlane.f32.xlu0 %v1275
          %v1523 = vpop.xlane.xlu0 %1522
          %1524 = vmax.xlane.f32.xlu0 %v1280
          %v1525 = vpop.xlane.xlu0 %1524
          %1526 = vmax.xlane.f32.xlu0 %v1285
          %v1527 = vpop.xlane.xlu0 %1526
          %1528 = vmax.xlane.f32.xlu0 %v1290
          %v1529 = vpop.xlane.xlu0 %1528
          %1530 = vmax.xlane.f32.xlu0 %v1295
          %v1531 = vpop.xlane.xlu0 %1530
          %1532 = vmax.xlane.f32.xlu0 %v1300
          %v1533 = vpop.xlane.xlu0 %1532
          %1534 = vmax.xlane.f32.xlu0 %v1305
          %v1535 = vpop.xlane.xlu0 %1534
          %1536 = vmax.xlane.f32.xlu0 %v1310
          %v1537 = vpop.xlane.xlu0 %1536
          %1538 = vmax.xlane.f32.xlu0 %v1428
          %v1539 = vpop.xlane.xlu0 %1538
          %1540 = vmax.xlane.f32.xlu0 %v1433
          %v1541 = vpop.xlane.xlu0 %1540
          %1542 = vmax.xlane.f32.xlu0 %v1438
          %v1543 = vpop.xlane.xlu0 %1542
          %1544 = vmax.xlane.f32.xlu0 %v1443
          %v1545 = vpop.xlane.xlu0 %1544
          %1546 = vmax.xlane.f32.xlu0 %v1448
          %v1547 = vpop.xlane.xlu0 %1546
          %1548 = vmax.xlane.f32.xlu0 %v1453
          %v1549 = vpop.xlane.xlu0 %1548
          %1550 = vmax.xlane.f32.xlu0 %v1458
          %v1551 = vpop.xlane.xlu0 %1550
          %1552 = vmax.xlane.f32.xlu0 %v1463
          %v1553 = vpop.xlane.xlu0 %1552
          %1554 = vmax.xlane.f32.xlu0 %v1468
          %v1555 = vpop.xlane.xlu0 %1554
          %1556 = vmax.xlane.f32.xlu0 %v1473
          %v1557 = vpop.xlane.xlu0 %1556
          %1558 = vmax.xlane.f32.xlu0 %v1478
          %v1559 = vpop.xlane.xlu0 %1558
          %1560 = vmax.xlane.f32.xlu0 %v1483
          %v1561 = vpop.xlane.xlu0 %1560
          %1562 = vmax.xlane.f32.xlu0 %v1488
          %v1563 = vpop.xlane.xlu0 %1562
          %1564 = vmax.xlane.f32.xlu0 %v1493
          %v1565 = vpop.xlane.xlu0 %1564
          %1566 = vmax.xlane.f32.xlu0 %v1498
          %v1567 = vpop.xlane.xlu0 %1566
          %1568 = vmax.xlane.f32.xlu0 %v1503
          %v1569 = vpop.xlane.xlu0 %1568
          %v1570 = vsub.f32 %v1235, %v1507
          %v1571 = vsub.f32 %v1240, %v1509
          %v1572 = vsub.f32 %v1245, %v1511
          %v1573 = vsub.f32 %v1250, %v1513
          %v1574 = vsub.f32 %v1255, %v1515
          %v1575 = vsub.f32 %v1260, %v1517
          %v1576 = vsub.f32 %v1265, %v1519
          %v1577 = vsub.f32 %v1270, %v1521
          %v1578 = vsub.f32 %v1275, %v1523
          %v1579 = vsub.f32 %v1280, %v1525
          %v1580 = vsub.f32 %v1285, %v1527
          %v1581 = vsub.f32 %v1290, %v1529
          %v1582 = vsub.f32 %v1295, %v1531
          %v1583 = vsub.f32 %v1300, %v1533
          %v1584 = vsub.f32 %v1305, %v1535
          %v1585 = vsub.f32 %v1310, %v1537
          %v1586 = vsub.f32 %v1428, %v1539
          %v1587 = vsub.f32 %v1433, %v1541
          %v1588 = vsub.f32 %v1438, %v1543
          %v1589 = vsub.f32 %v1443, %v1545
          %v1590 = vsub.f32 %v1448, %v1547
          %v1591 = vsub.f32 %v1453, %v1549
          %v1592 = vsub.f32 %v1458, %v1551
          %v1593 = vsub.f32 %v1463, %v1553
          %v1594 = vsub.f32 %v1468, %v1555
          %v1595 = vsub.f32 %v1473, %v1557
          %v1596 = vsub.f32 %v1478, %v1559
          %v1597 = vsub.f32 %v1483, %v1561
          %v1598 = vsub.f32 %v1488, %v1563
          %v1599 = vsub.f32 %v1493, %v1565
          %v1600 = vsub.f32 %v1498, %v1567
          %v1601 = vsub.f32 %v1503, %v1569
          %v1602 = vmul.f32 %v1570, 1.442695
          %v1603 = vpow.pop %v1602
          %v1604 = vmul.f32 %v1571, 1.442695
          %v1605 = vpow.pop %v1604
          %v1606 = vmul.f32 %v1572, 1.442695
          %v1607 = vpow.pop %v1606
          %v1608 = vmul.f32 %v1573, 1.442695
          %v1609 = vpow.pop %v1608
          %v1610 = vmul.f32 %v1574, 1.442695
          %v1611 = vpow.pop %v1610
          %v1612 = vmul.f32 %v1575, 1.442695
          %v1613 = vpow.pop %v1612
          %v1614 = vmul.f32 %v1576, 1.442695
          %v1615 = vpow.pop %v1614
          %v1616 = vmul.f32 %v1577, 1.442695
          %v1617 = vpow.pop %v1616
          %v1618 = vmul.f32 %v1578, 1.442695
          %v1619 = vpow.pop %v1618
          %v1620 = vmul.f32 %v1579, 1.442695
          %v1621 = vpow.pop %v1620
          %v1622 = vmul.f32 %v1580, 1.442695
          %v1623 = vpow.pop %v1622
          %v1624 = vmul.f32 %v1581, 1.442695
          %v1625 = vpow.pop %v1624
          %v1626 = vmul.f32 %v1582, 1.442695
          %v1627 = vpow.pop %v1626
          %v1628 = vmul.f32 %v1583, 1.442695
          %v1629 = vpow.pop %v1628
          %v1630 = vmul.f32 %v1584, 1.442695
          %v1631 = vpow.pop %v1630
          %v1632 = vmul.f32 %v1585, 1.442695
          %v1633 = vpow.pop %v1632
          %v1634 = vmul.f32 %v1586, 1.442695
          %v1635 = vpow.pop %v1634
          %v1636 = vmul.f32 %v1587, 1.442695
          %v1637 = vpow.pop %v1636
          %v1638 = vmul.f32 %v1588, 1.442695
          %v1639 = vpow.pop %v1638
          %v1640 = vmul.f32 %v1589, 1.442695
          %v1641 = vpow.pop %v1640
          %v1642 = vmul.f32 %v1590, 1.442695
          %v1643 = vpow.pop %v1642
          %v1644 = vmul.f32 %v1591, 1.442695
          %v1645 = vpow.pop %v1644
          %v1646 = vmul.f32 %v1592, 1.442695
          %v1647 = vpow.pop %v1646
          %v1648 = vmul.f32 %v1593, 1.442695
          %v1649 = vpow.pop %v1648
          %v1650 = vmul.f32 %v1594, 1.442695
          %v1651 = vpow.pop %v1650
          %v1652 = vmul.f32 %v1595, 1.442695
          %v1653 = vpow.pop %v1652
          %v1654 = vmul.f32 %v1596, 1.442695
          %v1655 = vpow.pop %v1654
          %v1656 = vmul.f32 %v1597, 1.442695
          %v1657 = vpow.pop %v1656
          %v1658 = vmul.f32 %v1598, 1.442695
          %v1659 = vpow.pop %v1658
          %v1660 = vmul.f32 %v1599, 1.442695
          %v1661 = vpow.pop %v1660
          %v1662 = vmul.f32 %v1600, 1.442695
          %v1663 = vpow.pop %v1662
          %v1664 = vmul.f32 %v1601, 1.442695
          %v1665 = vpow.pop %v1664
          %1666 = vadd.xlane.f32.xlu0 %v1603
          %v1667 = vpop.xlane.xlu0 %1666
          %1668 = vadd.xlane.f32.xlu0 %v1605
          %v1669 = vpop.xlane.xlu0 %1668
          %1670 = vadd.xlane.f32.xlu0 %v1607
          %v1671 = vpop.xlane.xlu0 %1670
          %1672 = vadd.xlane.f32.xlu0 %v1609
          %v1673 = vpop.xlane.xlu0 %1672
          %1674 = vadd.xlane.f32.xlu0 %v1611
          %v1675 = vpop.xlane.xlu0 %1674
          %1676 = vadd.xlane.f32.xlu0 %v1613
          %v1677 = vpop.xlane.xlu0 %1676
          %1678 = vadd.xlane.f32.xlu0 %v1615
          %v1679 = vpop.xlane.xlu0 %1678
          %1680 = vadd.xlane.f32.xlu0 %v1617
          %v1681 = vpop.xlane.xlu0 %1680
          %1682 = vadd.xlane.f32.xlu0 %v1619
          %v1683 = vpop.xlane.xlu0 %1682
          %1684 = vadd.xlane.f32.xlu0 %v1621
          %v1685 = vpop.xlane.xlu0 %1684
          %1686 = vadd.xlane.f32.xlu0 %v1623
          %v1687 = vpop.xlane.xlu0 %1686
          %1688 = vadd.xlane.f32.xlu0 %v1625
          %v1689 = vpop.xlane.xlu0 %1688
          %1690 = vadd.xlane.f32.xlu0 %v1627
          %v1691 = vpop.xlane.xlu0 %1690
          %1692 = vadd.xlane.f32.xlu0 %v1629
          %v1693 = vpop.xlane.xlu0 %1692
          %1694 = vadd.xlane.f32.xlu0 %v1631
          %v1695 = vpop.xlane.xlu0 %1694
          %1696 = vadd.xlane.f32.xlu0 %v1633
          %v1697 = vpop.xlane.xlu0 %1696
          %1698 = vadd.xlane.f32.xlu0 %v1635
          %v1699 = vpop.xlane.xlu0 %1698
          %1700 = vadd.xlane.f32.xlu0 %v1637
          %v1701 = vpop.xlane.xlu0 %1700
          %1702 = vadd.xlane.f32.xlu0 %v1639
          %v1703 = vpop.xlane.xlu0 %1702
          %1704 = vadd.xlane.f32.xlu0 %v1641
          %v1705 = vpop.xlane.xlu0 %1704
          %1706 = vadd.xlane.f32.xlu0 %v1643
          %v1707 = vpop.xlane.xlu0 %1706
          %1708 = vadd.xlane.f32.xlu0 %v1645
          %v1709 = vpop.xlane.xlu0 %1708
          %1710 = vadd.xlane.f32.xlu0 %v1647
          %v1711 = vpop.xlane.xlu0 %1710
          %1712 = vadd.xlane.f32.xlu0 %v1649
          %v1713 = vpop.xlane.xlu0 %1712
          %1714 = vadd.xlane.f32.xlu0 %v1651
          %v1715 = vpop.xlane.xlu0 %1714
          %1716 = vadd.xlane.f32.xlu0 %v1653
          %v1717 = vpop.xlane.xlu0 %1716
          %1718 = vadd.xlane.f32.xlu0 %v1655
          %v1719 = vpop.xlane.xlu0 %1718
          %1720 = vadd.xlane.f32.xlu0 %v1657
          %v1721 = vpop.xlane.xlu0 %1720
          %1722 = vadd.xlane.f32.xlu0 %v1659
          %v1723 = vpop.xlane.xlu0 %1722
          %1724 = vadd.xlane.f32.xlu0 %v1661
          %v1725 = vpop.xlane.xlu0 %1724
          %1726 = vadd.xlane.f32.xlu0 %v1663
          %v1727 = vpop.xlane.xlu0 %1726
          %1728 = vadd.xlane.f32.xlu0 %v1665
          %v1729 = vpop.xlane.xlu0 %1728
          %v1730 = vrcp.pop %v1667
          %v1731 = vmul.f32 %v1603, %v1730
          %v1732 = vrcp.pop %v1669
          %v1733 = vmul.f32 %v1605, %v1732
          %v1734 = vrcp.pop %v1671
          %v1735 = vmul.f32 %v1607, %v1734
          %v1736 = vrcp.pop %v1673
          %v1737 = vmul.f32 %v1609, %v1736
          %v1738 = vrcp.pop %v1675
          %v1739 = vmul.f32 %v1611, %v1738
          %v1740 = vrcp.pop %v1677
          %v1741 = vmul.f32 %v1613, %v1740
          %v1742 = vrcp.pop %v1679
          %v1743 = vmul.f32 %v1615, %v1742
          %v1744 = vrcp.pop %v1681
          %v1745 = vmul.f32 %v1617, %v1744
          %v1746 = vrcp.pop %v1683
          %v1747 = vmul.f32 %v1619, %v1746
          %v1748 = vrcp.pop %v1685
          %v1749 = vmul.f32 %v1621, %v1748
          %v1750 = vrcp.pop %v1687
          %v1751 = vmul.f32 %v1623, %v1750
          %v1752 = vrcp.pop %v1689
          %v1753 = vmul.f32 %v1625, %v1752
          %v1754 = vrcp.pop %v1691
          %v1755 = vmul.f32 %v1627, %v1754
          %v1756 = vrcp.pop %v1693
          %v1757 = vmul.f32 %v1629, %v1756
          %v1758 = vrcp.pop %v1695
          %v1759 = vmul.f32 %v1631, %v1758
          %v1760 = vrcp.pop %v1697
          %v1761 = vmul.f32 %v1633, %v1760
          %v1762 = vrcp.pop %v1699
          %v1763 = vmul.f32 %v1635, %v1762
          %v1764 = vrcp.pop %v1701
          %v1765 = vmul.f32 %v1637, %v1764
          %v1766 = vrcp.pop %v1703
          %v1767 = vmul.f32 %v1639, %v1766
          %v1768 = vrcp.pop %v1705
          %v1769 = vmul.f32 %v1641, %v1768
          %v1770 = vrcp.pop %v1707
          %v1771 = vmul.f32 %v1643, %v1770
          %v1772 = vrcp.pop %v1709
          %v1773 = vmul.f32 %v1645, %v1772
          %v1774 = vrcp.pop %v1711
          %v1775 = vmul.f32 %v1647, %v1774
          %v1776 = vrcp.pop %v1713
          %v1777 = vmul.f32 %v1649, %v1776
          %v1778 = vrcp.pop %v1715
          %v1779 = vmul.f32 %v1651, %v1778
          %v1780 = vrcp.pop %v1717
          %v1781 = vmul.f32 %v1653, %v1780
          %v1782 = vrcp.pop %v1719
          %v1783 = vmul.f32 %v1655, %v1782
          %v1784 = vrcp.pop %v1721
          %v1785 = vmul.f32 %v1657, %v1784
          %v1786 = vrcp.pop %v1723
          %v1787 = vmul.f32 %v1659, %v1786
          %v1788 = vrcp.pop %v1725
          %v1789 = vmul.f32 %v1661, %v1788
          %v1790 = vrcp.pop %v1727
          %v1791 = vmul.f32 %v1663, %v1790
          %v1792 = vrcp.pop %v1729
          %v1793 = vmul.f32 %v1665, %v1792
          %1794 = vmatprep.subr.mxu0 0.0
          %1795 = vmatpush1.xpose.msra.mxu0 %v1731
          %1796 = vmatprep.subr.mxu0 0.0
          %1797 = vmatpush1.xpose.msra.mxu0 %v1733
          %1798 = vmatprep.subr.mxu0 0.0
          %1799 = vmatpush1.xpose.msra.mxu0 %v1735
          %1800 = vmatprep.subr.mxu0 0.0
          %1801 = vmatpush1.xpose.msra.mxu0 %v1737
          %1802 = vmatprep.subr.mxu0 0.0
          %1803 = vmatpush1.xpose.msra.mxu0 %v1739
          %1804 = vmatprep.subr.mxu0 0.0
          %1805 = vmatpush1.xpose.msra.mxu0 %v1741
          %1806 = vmatprep.subr.mxu0 0.0
          %1807 = vmatpush1.xpose.msra.mxu0 %v1743
          %1808 = vmatprep.subr.mxu0 0.0
          %1809 = vmatpush1.xpose.msra.mxu0 %v1745
          %1810 = vmatprep.subr.mxu0 0.0
          %1811 = vmatpush1.xpose.msra.mxu0 %v1747
          %1812 = vmatprep.subr.mxu0 0.0
          %1813 = vmatpush1.xpose.msra.mxu0 %v1749
          %1814 = vmatprep.subr.mxu0 0.0
          %1815 = vmatpush1.xpose.msra.mxu0 %v1751
          %1816 = vmatprep.subr.mxu0 0.0
          %1817 = vmatpush1.xpose.msra.mxu0 %v1753
          %1818 = vmatprep.subr.mxu0 0.0
          %1819 = vmatpush1.xpose.msra.mxu0 %v1755
          %1820 = vmatprep.subr.mxu0 0.0
          %1821 = vmatpush1.xpose.msra.mxu0 %v1757
          %1822 = vmatprep.subr.mxu0 0.0
          %1823 = vmatpush1.xpose.msra.mxu0 %v1759
          %1824 = vmatprep.subr.mxu0 0.0
          %1825 = vmatpush1.xpose.msra.mxu0 %v1761
          %1826 = vmatprep.subr.mxu0 0.0
          %1827 = vmatpush1.xpose.msra.mxu0 0.0
          %1828 = vmatprep.subr.mxu0 0.0
          %1829 = vmatpush1.xpose.msra.mxu0 0.0
          %1830 = vmatprep.subr.mxu0 0.0
          %1831 = vmatpush1.xpose.msra.mxu0 0.0
          %1832 = vmatprep.subr.mxu0 0.0
          %1833 = vmatpush1.xpose.msra.mxu0 0.0
          %1834 = vmatprep.subr.mxu0 0.0
          %1835 = vmatpush1.xpose.msra.mxu0 0.0
          %1836 = vmatprep.subr.mxu0 0.0
          %1837 = vmatpush1.xpose.msra.mxu0 0.0
          %1838 = vmatprep.subr.mxu0 0.0
          %1839 = vmatpush1.xpose.msra.mxu0 0.0
          %1840 = vmatprep.subr.mxu0 0.0
          %1841 = vmatpush1.xpose.msra.mxu0 0.0
          %1842 = vmatprep.subr.mxu0 0.0
          %1843 = vmatpush1.xpose.msra.mxu0 0.0
          %1844 = vmatprep.subr.mxu0 0.0
          %1845 = vmatpush1.xpose.msra.mxu0 0.0
          %1846 = vmatprep.subr.mxu0 0.0
          %1847 = vmatpush1.xpose.msra.mxu0 0.0
          %1848 = vmatprep.subr.mxu0 0.0
          %1849 = vmatpush1.xpose.msra.mxu0 0.0
          %1850 = vmatprep.subr.mxu0 0.0
          %1851 = vmatpush1.xpose.msra.mxu0 0.0
          %1852 = vmatprep.subr.mxu0 0.0
          %1853 = vmatpush1.xpose.msra.mxu0 0.0
          %1854 = vmatprep.subr.mxu0 0.0
          %1855 = vmatpush1.xpose.msra.mxu0 0.0
          %1856 = vmatprep.subr.mxu0 0.0
          %1857 = vmatpush1.xpose.msra.mxu0 0.0
          %1858 = vmatprep.mubr.f32.mxu0 0.0
          %1859 = vmatmul.mubr.f32.gmra.mrb[0].mxu0 %v973
          %v1860 = vpop.f32.mrb[0].mxu0
          %v1861 = vadd.f32 0.0, %v1860
          %v1862 = vpop.f32.mrb[0].mxu0
          %1863 = vdwg.mxu0
          %1864 = vmatprep.subr.mxu0 0.0
          %1865 = vmatpush1.xpose.msra.mxu0 %v1763
          %1866 = vmatprep.subr.mxu0 0.0
          %1867 = vmatpush1.xpose.msra.mxu0 %v1765
          %1868 = vmatprep.subr.mxu0 0.0
          %1869 = vmatpush1.xpose.msra.mxu0 %v1767
          %1870 = vmatprep.subr.mxu0 0.0
          %1871 = vmatpush1.xpose.msra.mxu0 %v1769
          %1872 = vmatprep.subr.mxu0 0.0
          %1873 = vmatpush1.xpose.msra.mxu0 %v1771
          %1874 = vmatprep.subr.mxu0 0.0
          %1875 = vmatpush1.xpose.msra.mxu0 %v1773
          %1876 = vmatprep.subr.mxu0 0.0
          %1877 = vmatpush1.xpose.msra.mxu0 %v1775
          %1878 = vmatprep.subr.mxu0 0.0
          %1879 = vmatpush1.xpose.msra.mxu0 %v1777
          %1880 = vmatprep.subr.mxu0 0.0
          %1881 = vmatpush1.xpose.msra.mxu0 %v1779
          %1882 = vmatprep.subr.mxu0 0.0
          %1883 = vmatpush1.xpose.msra.mxu0 %v1781
          %1884 = vmatprep.subr.mxu0 0.0
          %1885 = vmatpush1.xpose.msra.mxu0 %v1783
          %1886 = vmatprep.subr.mxu0 0.0
          %1887 = vmatpush1.xpose.msra.mxu0 %v1785
          %1888 = vmatprep.subr.mxu0 0.0
          %1889 = vmatpush1.xpose.msra.mxu0 %v1787
          %1890 = vmatprep.subr.mxu0 0.0
          %1891 = vmatpush1.xpose.msra.mxu0 %v1789
          %1892 = vmatprep.subr.mxu0 0.0
          %1893 = vmatpush1.xpose.msra.mxu0 %v1791
          %1894 = vmatprep.subr.mxu0 0.0
          %1895 = vmatpush1.xpose.msra.mxu0 %v1793
          %1896 = vmatprep.subr.mxu0 0.0
          %1897 = vmatpush1.xpose.msra.mxu0 0.0
          %1898 = vmatprep.subr.mxu0 0.0
          %1899 = vmatpush1.xpose.msra.mxu0 0.0
          %1900 = vmatprep.subr.mxu0 0.0
          %1901 = vmatpush1.xpose.msra.mxu0 0.0
          %1902 = vmatprep.subr.mxu0 0.0
          %1903 = vmatpush1.xpose.msra.mxu0 0.0
          %1904 = vmatprep.subr.mxu0 0.0
          %1905 = vmatpush1.xpose.msra.mxu0 0.0
          %1906 = vmatprep.subr.mxu0 0.0
          %1907 = vmatpush1.xpose.msra.mxu0 0.0
          %1908 = vmatprep.subr.mxu0 0.0
          %1909 = vmatpush1.xpose.msra.mxu0 0.0
          %1910 = vmatprep.subr.mxu0 0.0
          %1911 = vmatpush1.xpose.msra.mxu0 0.0
          %1912 = vmatprep.subr.mxu0 0.0
          %1913 = vmatpush1.xpose.msra.mxu0 0.0
          %1914 = vmatprep.subr.mxu0 0.0
          %1915 = vmatpush1.xpose.msra.mxu0 0.0
          %1916 = vmatprep.subr.mxu0 0.0
          %1917 = vmatpush1.xpose.msra.mxu0 0.0
          %1918 = vmatprep.subr.mxu0 0.0
          %1919 = vmatpush1.xpose.msra.mxu0 0.0
          %1920 = vmatprep.subr.mxu0 0.0
          %1921 = vmatpush1.xpose.msra.mxu0 0.0
          %1922 = vmatprep.subr.mxu0 0.0
          %1923 = vmatpush1.xpose.msra.mxu0 0.0
          %1924 = vmatprep.subr.mxu0 0.0
          %1925 = vmatpush1.xpose.msra.mxu0 0.0
          %1926 = vmatprep.subr.mxu0 0.0
          %1927 = vmatpush1.xpose.msra.mxu0 0.0
          %1928 = vmatprep.mubr.f32.mxu0 0.0
          %1929 = vmatmul.mubr.f32.gmra.mrb[0].mxu0 %v1053
          %v1930 = vpop.f32.mrb[0].mxu0
          %v1931 = vadd.f32 0.0, %v1930
          %v1932 = vpop.f32.mrb[0].mxu0
          %1933 = vdwg.mxu0
          %v1934 = vadd.f32 %v827, %v1861
          %v1935 = vadd.f32 %v828, %v1931
          %s1936 = scalar_lea.vmem [#allocation11], %s829
          %v1937 = vld [vmem:[%s1936] sm:$0xff]
          %s1938 = scalar_lea.vmem [#allocation13], %s829
          %v1939 = vld [vmem:[%s1938] sm:$0xff]
          %v1940 = vrot.slane %v1934, 4
          %v1941 = vadd.f32 %v1934, %v1940
          %v1942 = vrot.slane %v1941, 2
          %v1943 = vadd.f32 %v1941, %v1942
          %v1944 = vrot.slane %v1943, 1
          %v1945 = vadd.f32 %v1943, %v1944
          %v1946 = vrot.slane %v1935, 4
          %v1947 = vadd.f32 %v1935, %v1946
          %v1948 = vrot.slane %v1947, 2
          %v1949 = vadd.f32 %v1947, %v1948
          %v1950 = vrot.slane %v1949, 1
          %v1951 = vadd.f32 %v1949, %v1950
          %v1952 = vmul.f32 %v1945, %v846
          %v1953 = vmul.f32 %v1951, %v846
          %v1954 = vsub.f32 %v1934, %v1952
          %v1955 = vsub.f32 %v1935, %v1953
          %v1956 = vmul.f32 %v1954, %v1954
          %v1957 = vmul.f32 %v1955, %v1955
          %v1958 = vrot.slane %v1956, 4
          %v1959 = vadd.f32 %v1956, %v1958
          %v1960 = vrot.slane %v1959, 2
          %v1961 = vadd.f32 %v1959, %v1960
          %v1962 = vrot.slane %v1961, 1
          %v1963 = vadd.f32 %v1961, %v1962
          %v1964 = vrot.slane %v1957, 4
          %v1965 = vadd.f32 %v1957, %v1964
          %v1966 = vrot.slane %v1965, 2
          %v1967 = vadd.f32 %v1965, %v1966
          %v1968 = vrot.slane %v1967, 1
          %v1969 = vadd.f32 %v1967, %v1968
          %v1970 = vmul.f32 %v1963, %v846
          %v1971 = vmul.f32 %v1969, %v846
          %v1972 = vadd.f32 %v1970, 1e-05
          %v1973 = vadd.f32 %v1971, 1e-05
          %v1974 = vrsqrt.pop %v1972
          %v1975 = vrsqrt.pop %v1973
          %v1976 = vmul.f32 %v1954, %v1974
          %v1977 = vmul.f32 %v1955, %v1975
          %v1978 = vmul.f32 %v1976, %v1937
          %v1979 = vmul.f32 %v1977, %v1937
          %v1980 = vadd.f32 %v1978, %v1939
          %v1981 = vadd.f32 %v1979, %v1939
          %s1982 = smul.u32 %s822, 32
          %s1983 = scalar_lea.vmem %s10, %s1982
          %v1984 = vld [vmem:[%s1983] sm:$0xff]
          %v1985 = vld [vmem:[%s1983 + $0x8] sm:$0xff]
          %v1986 = vld [vmem:[%s1983 + $0x10] sm:$0xff]
          %v1987 = vld [vmem:[%s1983 + $0x18] sm:$0xff]
          %s1988 = scalar_lea.vmem %s11, %s1982
          %v1989 = vld [vmem:[%s1988] sm:$0xff]
          %v1990 = vld [vmem:[%s1988 + $0x8] sm:$0xff]
          %v1991 = vld [vmem:[%s1988 + $0x10] sm:$0xff]
          %v1992 = vld [vmem:[%s1988 + $0x18] sm:$0xff]
          %v1994 = vsel %vm886, %v1984, 0
          %v1997 = vsel %vm886, %v1985, 0
          %v2000 = vsel %vm886, %v1986, 0
          %v2003 = vsel %vm886, %v1987, 0
          %2005 = vmatprep.subr.mxu0 0.0
          %2006 = vmatpush1.msra.mxu0 %v1980
          %2007 = vmatprep.subr.mxu0 0.0
          %2008 = vmatpush1.msra.mxu0 0.0
          %2009 = vmatprep.subr.mxu0 0.0
          %2010 = vmatpush1.msra.mxu0 0.0
          %2011 = vmatprep.subr.mxu0 0.0
          %2012 = vmatpush1.msra.mxu0 0.0
          %2013 = vmatprep.subr.mxu0 0.0
          %2014 = vmatpush1.msra.mxu0 0.0
          %2015 = vmatprep.subr.mxu0 0.0
          %2016 = vmatpush1.msra.mxu0 0.0
          %2017 = vmatprep.subr.mxu0 0.0
          %2018 = vmatpush1.msra.mxu0 0.0
          %2019 = vmatprep.subr.mxu0 0.0
          %2020 = vmatpush1.msra.mxu0 0.0
          %2021 = vmatprep.subr.mxu0 0.0
          %2022 = vmatpush1.msra.mxu0 0.0
          %2023 = vmatprep.subr.mxu0 0.0
          %2024 = vmatpush1.msra.mxu0 0.0
          %2025 = vmatprep.subr.mxu0 0.0
          %2026 = vmatpush1.msra.mxu0 0.0
          %2027 = vmatprep.subr.mxu0 0.0
          %2028 = vmatpush1.msra.mxu0 0.0
          %2029 = vmatprep.subr.mxu0 0.0
          %2030 = vmatpush1.msra.mxu0 0.0
          %2031 = vmatprep.subr.mxu0 0.0
          %2032 = vmatpush1.msra.mxu0 0.0
          %2033 = vmatprep.subr.mxu0 0.0
          %2034 = vmatpush1.msra.mxu0 0.0
          %2035 = vmatprep.subr.mxu0 0.0
          %2036 = vmatpush1.msra.mxu0 0.0
          %2037 = vmatprep.subr.mxu0 0.0
          %2038 = vmatpush1.msra.mxu0 0.0
          %2039 = vmatprep.subr.mxu0 0.0
          %2040 = vmatpush1.msra.mxu0 0.0
          %2041 = vmatprep.subr.mxu0 0.0
          %2042 = vmatpush1.msra.mxu0 0.0
          %2043 = vmatprep.subr.mxu0 0.0
          %2044 = vmatpush1.msra.mxu0 0.0
          %2045 = vmatprep.subr.mxu0 0.0
          %2046 = vmatpush1.msra.mxu0 0.0
          %2047 = vmatprep.subr.mxu0 0.0
          %2048 = vmatpush1.msra.mxu0 0.0
          %2049 = vmatprep.subr.mxu0 0.0
          %2050 = vmatpush1.msra.mxu0 0.0
          %2051 = vmatprep.subr.mxu0 0.0
          %2052 = vmatpush1.msra.mxu0 0.0
          %2053 = vmatprep.subr.mxu0 0.0
          %2054 = vmatpush1.msra.mxu0 0.0
          %2055 = vmatprep.subr.mxu0 0.0
          %2056 = vmatpush1.msra.mxu0 0.0
          %2057 = vmatprep.subr.mxu0 0.0
          %2058 = vmatpush1.msra.mxu0 0.0
          %2059 = vmatprep.subr.mxu0 0.0
          %2060 = vmatpush1.msra.mxu0 0.0
          %2061 = vmatprep.subr.mxu0 0.0
          %2062 = vmatpush1.msra.mxu0 0.0
          %2063 = vmatprep.subr.mxu0 0.0
          %2064 = vmatpush1.msra.mxu0 0.0
          %2065 = vmatprep.subr.mxu0 0.0
          %2066 = vmatpush1.msra.mxu0 0.0
          %2067 = vmatprep.subr.mxu0 0.0
          %2068 = vmatpush1.msra.mxu0 0.0
          %2069 = vmatprep.mubr.f32.mxu0 0.0
          %2070 = vmatmul.mubr.f32.gmra.mrb[0].mxu0 %v1994
          %v2071 = vpop.f32.mrb[0].mxu0
          %v2072 = vadd.f32 %v1989, %v2071
          %v2073 = vpop.f32.mrb[0].mxu0
          %2074 = vmatprep.mubr.f32.mxu0 0.0
          %2075 = vmatmul.mubr.f32.gmra.mrb[0].mxu0 %v1997
          %v2076 = vpop.f32.mrb[0].mxu0
          %v2077 = vadd.f32 %v1990, %v2076
          %v2078 = vpop.f32.mrb[0].mxu0
          %2079 = vmatprep.mubr.f32.mxu0 0.0
          %2080 = vmatmul.mubr.f32.gmra.mrb[0].mxu0 %v2000
          %v2081 = vpop.f32.mrb[0].mxu0
          %v2082 = vadd.f32 %v1991, %v2081
          %v2083 = vpop.f32.mrb[0].mxu0
          %2084 = vmatprep.mubr.f32.mxu0 0.0
          %2085 = vmatmul.mubr.f32.gmra.mrb[0].mxu0 %v2003
          %v2086 = vpop.f32.mrb[0].mxu0
          %v2087 = vadd.f32 %v1992, %v2086
          %v2088 = vpop.f32.mrb[0].mxu0
          %2089 = vdwg.mxu0
          %2090 = vmatprep.subr.mxu0 0.0
          %2091 = vmatpush1.msra.mxu0 %v1981
          %2092 = vmatprep.subr.mxu0 0.0
          %2093 = vmatpush1.msra.mxu0 0.0
          %2094 = vmatprep.subr.mxu0 0.0
          %2095 = vmatpush1.msra.mxu0 0.0
          %2096 = vmatprep.subr.mxu0 0.0
          %2097 = vmatpush1.msra.mxu0 0.0
          %2098 = vmatprep.subr.mxu0 0.0
          %2099 = vmatpush1.msra.mxu0 0.0
          %2100 = vmatprep.subr.mxu0 0.0
          %2101 = vmatpush1.msra.mxu0 0.0
          %2102 = vmatprep.subr.mxu0 0.0
          %2103 = vmatpush1.msra.mxu0 0.0
          %2104 = vmatprep.subr.mxu0 0.0
          %2105 = vmatpush1.msra.mxu0 0.0
          %2106 = vmatprep.subr.mxu0 0.0
          %2107 = vmatpush1.msra.mxu0 0.0
          %2108 = vmatprep.subr.mxu0 0.0
          %2109 = vmatpush1.msra.mxu0 0.0
          %2110 = vmatprep.subr.mxu0 0.0
          %2111 = vmatpush1.msra.mxu0 0.0
          %2112 = vmatprep.subr.mxu0 0.0
          %2113 = vmatpush1.msra.mxu0 0.0
          %2114 = vmatprep.subr.mxu0 0.0
          %2115 = vmatpush1.msra.mxu0 0.0
          %2116 = vmatprep.subr.mxu0 0.0
          %2117 = vmatpush1.msra.mxu0 0.0
          %2118 = vmatprep.subr.mxu0 0.0
          %2119 = vmatpush1.msra.mxu0 0.0
          %2120 = vmatprep.subr.mxu0 0.0
          %2121 = vmatpush1.msra.mxu0 0.0
          %2122 = vmatprep.subr.mxu0 0.0
          %2123 = vmatpush1.msra.mxu0 0.0
          %2124 = vmatprep.subr.mxu0 0.0
          %2125 = vmatpush1.msra.mxu0 0.0
          %2126 = vmatprep.subr.mxu0 0.0
          %2127 = vmatpush1.msra.mxu0 0.0
          %2128 = vmatprep.subr.mxu0 0.0
          %2129 = vmatpush1.msra.mxu0 0.0
          %2130 = vmatprep.subr.mxu0 0.0
          %2131 = vmatpush1.msra.mxu0 0.0
          %2132 = vmatprep.subr.mxu0 0.0
          %2133 = vmatpush1.msra.mxu0 0.0
          %2134 = vmatprep.subr.mxu0 0.0
          %2135 = vmatpush1.msra.mxu0 0.0
          %2136 = vmatprep.subr.mxu0 0.0
          %2137 = vmatpush1.msra.mxu0 0.0
          %2138 = vmatprep.subr.mxu0 0.0
          %2139 = vmatpush1.msra.mxu0 0.0
          %2140 = vmatprep.subr.mxu0 0.0
          %2141 = vmatpush1.msra.mxu0 0.0
          %2142 = vmatprep.subr.mxu0 0.0
          %2143 = vmatpush1.msra.mxu0 0.0
          %2144 = vmatprep.subr.mxu0 0.0
          %2145 = vmatpush1.msra.mxu0 0.0
          %2146 = vmatprep.subr.mxu0 0.0
          %2147 = vmatpush1.msra.mxu0 0.0
          %2148 = vmatprep.subr.mxu0 0.0
          %2149 = vmatpush1.msra.mxu0 0.0
          %2150 = vmatprep.subr.mxu0 0.0
          %2151 = vmatpush1.msra.mxu0 0.0
          %2152 = vmatprep.subr.mxu0 0.0
          %2153 = vmatpush1.msra.mxu0 0.0
          %2154 = vmatprep.mubr.f32.mxu0 0.0
          %2155 = vmatmul.mubr.f32.gmra.mrb[0].mxu0 %v1994
          %v2156 = vpop.f32.mrb[0].mxu0
          %v2157 = vadd.f32 %v1989, %v2156
          %v2158 = vpop.f32.mrb[0].mxu0
          %2159 = vmatprep.mubr.f32.mxu0 0.0
          %2160 = vmatmul.mubr.f32.gmra.mrb[0].mxu0 %v1997
          %v2161 = vpop.f32.mrb[0].mxu0
          %v2162 = vadd.f32 %v1990, %v2161
          %v2163 = vpop.f32.mrb[0].mxu0
          %2164 = vmatprep.mubr.f32.mxu0 0.0
          %2165 = vmatmul.mubr.f32.gmra.mrb[0].mxu0 %v2000
          %v2166 = vpop.f32.mrb[0].mxu0
          %v2167 = vadd.f32 %v1991, %v2166
          %v2168 = vpop.f32.mrb[0].mxu0
          %2169 = vmatprep.mubr.f32.mxu0 0.0
          %2170 = vmatmul.mubr.f32.gmra.mrb[0].mxu0 %v2003
          %v2171 = vpop.f32.mrb[0].mxu0
          %v2172 = vadd.f32 %v1992, %v2171
          %v2173 = vpop.f32.mrb[0].mxu0
          %2174 = vdwg.mxu0
          %v2175 = vmax.f32 %v2072, 0.0
          %v2176 = vmax.f32 %v2077, 0.0
          %v2177 = vmax.f32 %v2082, 0.0
          %v2178 = vmax.f32 %v2087, 0.0
          %v2179 = vmax.f32 %v2157, 0.0
          %v2180 = vmax.f32 %v2162, 0.0
          %v2181 = vmax.f32 %v2167, 0.0
          %v2182 = vmax.f32 %v2172, 0.0
          %s2183 = scalar_lea.vmem %s12, %s829
          %v2184 = vld [vmem:[%s2183] sm:$0xff]
          %s2185 = scalar_lea.vmem [#allocation14], %s829
          %v2186 = vld [vmem:[%s2185] sm:$0xff]
          %vm2187 = vcmask 261120
          %v2189 = vsel %vm2187, %v2184, 0
          %2191 = vmatprep.subr.mxu0 0.0
          %2192 = vmatpush1.msra.mxu0 %v2175
          %2193 = vmatprep.subr.mxu0 0.0
          %2194 = vmatpush1.msra.mxu0 %v2176
          %2195 = vmatprep.subr.mxu0 0.0
          %2196 = vmatpush1.msra.mxu0 %v2177
          %2197 = vmatprep.subr.mxu0 0.0
          %2198 = vmatpush1.msra.mxu0 %v2178
          %2199 = vmatprep.subr.mxu0 0.0
          %2200 = vmatpush1.msra.mxu0 0.0
          %2201 = vmatprep.subr.mxu0 0.0
          %2202 = vmatpush1.msra.mxu0 0.0
          %2203 = vmatprep.subr.mxu0 0.0
          %2204 = vmatpush1.msra.mxu0 0.0
          %2205 = vmatprep.subr.mxu0 0.0
          %2206 = vmatpush1.msra.mxu0 0.0
          %2207 = vmatprep.subr.mxu0 0.0
          %2208 = vmatpush1.msra.mxu0 0.0
          %2209 = vmatprep.subr.mxu0 0.0
          %2210 = vmatpush1.msra.mxu0 0.0
          %2211 = vmatprep.subr.mxu0 0.0
          %2212 = vmatpush1.msra.mxu0 0.0
          %2213 = vmatprep.subr.mxu0 0.0
          %2214 = vmatpush1.msra.mxu0 0.0
          %2215 = vmatprep.subr.mxu0 0.0
          %2216 = vmatpush1.msra.mxu0 0.0
          %2217 = vmatprep.subr.mxu0 0.0
          %2218 = vmatpush1.msra.mxu0 0.0
          %2219 = vmatprep.subr.mxu0 0.0
          %2220 = vmatpush1.msra.mxu0 0.0
          %2221 = vmatprep.subr.mxu0 0.0
          %2222 = vmatpush1.msra.mxu0 0.0
          %2223 = vmatprep.subr.mxu0 0.0
          %2224 = vmatpush1.msra.mxu0 0.0
          %2225 = vmatprep.subr.mxu0 0.0
          %2226 = vmatpush1.msra.mxu0 0.0
          %2227 = vmatprep.subr.mxu0 0.0
          %2228 = vmatpush1.msra.mxu0 0.0
          %2229 = vmatprep.subr.mxu0 0.0
          %2230 = vmatpush1.msra.mxu0 0.0
          %2231 = vmatprep.subr.mxu0 0.0
          %2232 = vmatpush1.msra.mxu0 0.0
          %2233 = vmatprep.subr.mxu0 0.0
          %2234 = vmatpush1.msra.mxu0 0.0
          %2235 = vmatprep.subr.mxu0 0.0
          %2236 = vmatpush1.msra.mxu0 0.0
          %2237 = vmatprep.subr.mxu0 0.0
          %2238 = vmatpush1.msra.mxu0 0.0
          %2239 = vmatprep.subr.mxu0 0.0
          %2240 = vmatpush1.msra.mxu0 0.0
          %2241 = vmatprep.subr.mxu0 0.0
          %2242 = vmatpush1.msra.mxu0 0.0
          %2243 = vmatprep.subr.mxu0 0.0
          %2244 = vmatpush1.msra.mxu0 0.0
          %2245 = vmatprep.subr.mxu0 0.0
          %2246 = vmatpush1.msra.mxu0 0.0
          %2247 = vmatprep.subr.mxu0 0.0
          %2248 = vmatpush1.msra.mxu0 0.0
          %2249 = vmatprep.subr.mxu0 0.0
          %2250 = vmatpush1.msra.mxu0 0.0
          %2251 = vmatprep.subr.mxu0 0.0
          %2252 = vmatpush1.msra.mxu0 0.0
          %2253 = vmatprep.subr.mxu0 0.0
          %2254 = vmatpush1.msra.mxu0 0.0
          %2255 = vmatprep.mubr.f32.mxu0 0.0
          %2256 = vmatmul.mubr.f32.gmra.mrb[0].mxu0 %v2189
          %v2257 = vpop.f32.mrb[0].mxu0
          %v2258 = vadd.f32 %v2186, %v2257
          %v2259 = vpop.f32.mrb[0].mxu0
          %2260 = vdwg.mxu0
          %2261 = vmatprep.subr.mxu0 0.0
          %2262 = vmatpush1.msra.mxu0 %v2179
          %2263 = vmatprep.subr.mxu0 0.0
          %2264 = vmatpush1.msra.mxu0 %v2180
          %2265 = vmatprep.subr.mxu0 0.0
          %2266 = vmatpush1.msra.mxu0 %v2181
          %2267 = vmatprep.subr.mxu0 0.0
          %2268 = vmatpush1.msra.mxu0 %v2182
          %2269 = vmatprep.subr.mxu0 0.0
          %2270 = vmatpush1.msra.mxu0 0.0
          %2271 = vmatprep.subr.mxu0 0.0
          %2272 = vmatpush1.msra.mxu0 0.0
          %2273 = vmatprep.subr.mxu0 0.0
          %2274 = vmatpush1.msra.mxu0 0.0
          %2275 = vmatprep.subr.mxu0 0.0
          %2276 = vmatpush1.msra.mxu0 0.0
          %2277 = vmatprep.subr.mxu0 0.0
          %2278 = vmatpush1.msra.mxu0 0.0
          %2279 = vmatprep.subr.mxu0 0.0
          %2280 = vmatpush1.msra.mxu0 0.0
          %2281 = vmatprep.subr.mxu0 0.0
          %2282 = vmatpush1.msra.mxu0 0.0
          %2283 = vmatprep.subr.mxu0 0.0
          %2284 = vmatpush1.msra.mxu0 0.0
          %2285 = vmatprep.subr.mxu0 0.0
          %2286 = vmatpush1.msra.mxu0 0.0
          %2287 = vmatprep.subr.mxu0 0.0
          %2288 = vmatpush1.msra.mxu0 0.0
          %2289 = vmatprep.subr.mxu0 0.0
          %2290 = vmatpush1.msra.mxu0 0.0
          %2291 = vmatprep.subr.mxu0 0.0
          %2292 = vmatpush1.msra.mxu0 0.0
          %2293 = vmatprep.subr.mxu0 0.0
          %2294 = vmatpush1.msra.mxu0 0.0
          %2295 = vmatprep.subr.mxu0 0.0
          %2296 = vmatpush1.msra.mxu0 0.0
          %2297 = vmatprep.subr.mxu0 0.0
          %2298 = vmatpush1.msra.mxu0 0.0
          %2299 = vmatprep.subr.mxu0 0.0
          %2300 = vmatpush1.msra.mxu0 0.0
          %2301 = vmatprep.subr.mxu0 0.0
          %2302 = vmatpush1.msra.mxu0 0.0
          %2303 = vmatprep.subr.mxu0 0.0
          %2304 = vmatpush1.msra.mxu0 0.0
          %2305 = vmatprep.subr.mxu0 0.0
          %2306 = vmatpush1.msra.mxu0 0.0
          %2307 = vmatprep.subr.mxu0 0.0
          %2308 = vmatpush1.msra.mxu0 0.0
          %2309 = vmatprep.subr.mxu0 0.0
          %2310 = vmatpush1.msra.mxu0 0.0
          %2311 = vmatprep.subr.mxu0 0.0
          %2312 = vmatpush1.msra.mxu0 0.0
          %2313 = vmatprep.subr.mxu0 0.0
          %2314 = vmatpush1.msra.mxu0 0.0
          %2315 = vmatprep.subr.mxu0 0.0
          %2316 = vmatpush1.msra.mxu0 0.0
          %2317 = vmatprep.subr.mxu0 0.0
          %2318 = vmatpush1.msra.mxu0 0.0
          %2319 = vmatprep.subr.mxu0 0.0
          %2320 = vmatpush1.msra.mxu0 0.0
          %2321 = vmatprep.subr.mxu0 0.0
          %2322 = vmatpush1.msra.mxu0 0.0
          %2323 = vmatprep.subr.mxu0 0.0
          %2324 = vmatpush1.msra.mxu0 0.0
          %2325 = vmatprep.mubr.f32.mxu0 0.0
          %2326 = vmatmul.mubr.f32.gmra.mrb[0].mxu0 %v2189
          %v2327 = vpop.f32.mrb[0].mxu0
          %v2328 = vadd.f32 %v2186, %v2327
          %v2329 = vpop.f32.mrb[0].mxu0
          %2330 = vdwg.mxu0
          %v2331 = vadd.f32 %v1934, %v2258
          %v2332 = vadd.f32 %v1935, %v2328
        $region125: #{tpu_custom_call.1} parent=83 // loop_footer
          %s826 = sadd.s32 1, %s822
        $region126: #{tpu_custom_call.1} parent=83 // loop_footer_branch
          %821 = sbr.rel target = $region122
        $region127: #{tpu_custom_call.1} parent=83 // loop_exit
          _
        %v2333 = vld [vmem:[%s14] sm:$0xff]
        %v2334 = vld [vmem:[%s14 + $0x8] sm:$0xff]
        %v2335 = vld [vmem:[#allocation16] sm:$0xff]
        %v2336 = vld [vmem:[#allocation16 + $0x8] sm:$0xff]
        %vm2337 = vcmask 64512
        %v2339 = vsel %vm2337, %v2333, 0
        %v2342 = vsel %vm2337, %v2334, 0
        %2344 = vmatprep.subr.mxu0 0.0
        %2345 = vmatpush1.msra.mxu0 %v827
        %2346 = vmatprep.subr.mxu0 0.0
        %2347 = vmatpush1.msra.mxu0 0.0
        %2348 = vmatprep.subr.mxu0 0.0
        %2349 = vmatpush1.msra.mxu0 0.0
        %2350 = vmatprep.subr.mxu0 0.0
        %2351 = vmatpush1.msra.mxu0 0.0
        %2352 = vmatprep.subr.mxu0 0.0
        %2353 = vmatpush1.msra.mxu0 0.0
        %2354 = vmatprep.subr.mxu0 0.0
        %2355 = vmatpush1.msra.mxu0 0.0
        %2356 = vmatprep.subr.mxu0 0.0
        %2357 = vmatpush1.msra.mxu0 0.0
        %2358 = vmatprep.subr.mxu0 0.0
        %2359 = vmatpush1.msra.mxu0 0.0
        %2360 = vmatprep.subr.mxu0 0.0
        %2361 = vmatpush1.msra.mxu0 0.0
        %2362 = vmatprep.subr.mxu0 0.0
        %2363 = vmatpush1.msra.mxu0 0.0
        %2364 = vmatprep.subr.mxu0 0.0
        %2365 = vmatpush1.msra.mxu0 0.0
        %2366 = vmatprep.subr.mxu0 0.0
        %2367 = vmatpush1.msra.mxu0 0.0
        %2368 = vmatprep.subr.mxu0 0.0
        %2369 = vmatpush1.msra.mxu0 0.0
        %2370 = vmatprep.subr.mxu0 0.0
        %2371 = vmatpush1.msra.mxu0 0.0
        %2372 = vmatprep.subr.mxu0 0.0
        %2373 = vmatpush1.msra.mxu0 0.0
        %2374 = vmatprep.subr.mxu0 0.0
        %2375 = vmatpush1.msra.mxu0 0.0
        %2376 = vmatprep.subr.mxu0 0.0
        %2377 = vmatpush1.msra.mxu0 0.0
        %2378 = vmatprep.subr.mxu0 0.0
        %2379 = vmatpush1.msra.mxu0 0.0
        %2380 = vmatprep.subr.mxu0 0.0
        %2381 = vmatpush1.msra.mxu0 0.0
        %2382 = vmatprep.subr.mxu0 0.0
        %2383 = vmatpush1.msra.mxu0 0.0
        %2384 = vmatprep.subr.mxu0 0.0
        %2385 = vmatpush1.msra.mxu0 0.0
        %2386 = vmatprep.subr.mxu0 0.0
        %2387 = vmatpush1.msra.mxu0 0.0
        %2388 = vmatprep.subr.mxu0 0.0
        %2389 = vmatpush1.msra.mxu0 0.0
        %2390 = vmatprep.subr.mxu0 0.0
        %2391 = vmatpush1.msra.mxu0 0.0
        %2392 = vmatprep.subr.mxu0 0.0
        %2393 = vmatpush1.msra.mxu0 0.0
        %2394 = vmatprep.subr.mxu0 0.0
        %2395 = vmatpush1.msra.mxu0 0.0
        %2396 = vmatprep.subr.mxu0 0.0
        %2397 = vmatpush1.msra.mxu0 0.0
        %2398 = vmatprep.subr.mxu0 0.0
        %2399 = vmatpush1.msra.mxu0 0.0
        %2400 = vmatprep.subr.mxu0 0.0
        %2401 = vmatpush1.msra.mxu0 0.0
        %2402 = vmatprep.subr.mxu0 0.0
        %2403 = vmatpush1.msra.mxu0 0.0
        %2404 = vmatprep.subr.mxu0 0.0
        %2405 = vmatpush1.msra.mxu0 0.0
        %2406 = vmatprep.subr.mxu0 0.0
        %2407 = vmatpush1.msra.mxu0 0.0
        %2408 = vmatprep.mubr.f32.mxu0 0.0
        %2409 = vmatmul.mubr.f32.gmra.mrb[0].mxu0 %v2339
        %v2410 = vpop.f32.mrb[0].mxu0
        %v2411 = vadd.f32 %v2335, %v2410
        %v2412 = vpop.f32.mrb[0].mxu0
        %2413 = vmatprep.mubr.f32.mxu0 0.0
        %2414 = vmatmul.mubr.f32.gmra.mrb[0].mxu0 %v2342
        %v2415 = vpop.f32.mrb[0].mxu0
        %v2416 = vadd.f32 %v2336, %v2415
        %v2417 = vpop.f32.mrb[0].mxu0
        %2418 = vdwg.mxu0
        %2419 = vmatprep.subr.mxu0 0.0
        %2420 = vmatpush1.msra.mxu0 %v828
        %2421 = vmatprep.subr.mxu0 0.0
        %2422 = vmatpush1.msra.mxu0 0.0
        %2423 = vmatprep.subr.mxu0 0.0
        %2424 = vmatpush1.msra.mxu0 0.0
        %2425 = vmatprep.subr.mxu0 0.0
        %2426 = vmatpush1.msra.mxu0 0.0
        %2427 = vmatprep.subr.mxu0 0.0
        %2428 = vmatpush1.msra.mxu0 0.0
        %2429 = vmatprep.subr.mxu0 0.0
        %2430 = vmatpush1.msra.mxu0 0.0
        %2431 = vmatprep.subr.mxu0 0.0
        %2432 = vmatpush1.msra.mxu0 0.0
        %2433 = vmatprep.subr.mxu0 0.0
        %2434 = vmatpush1.msra.mxu0 0.0
        %2435 = vmatprep.subr.mxu0 0.0
        %2436 = vmatpush1.msra.mxu0 0.0
        %2437 = vmatprep.subr.mxu0 0.0
        %2438 = vmatpush1.msra.mxu0 0.0
        %2439 = vmatprep.subr.mxu0 0.0
        %2440 = vmatpush1.msra.mxu0 0.0
        %2441 = vmatprep.subr.mxu0 0.0
        %2442 = vmatpush1.msra.mxu0 0.0
        %2443 = vmatprep.subr.mxu0 0.0
        %2444 = vmatpush1.msra.mxu0 0.0
        %2445 = vmatprep.subr.mxu0 0.0
        %2446 = vmatpush1.msra.mxu0 0.0
        %2447 = vmatprep.subr.mxu0 0.0
        %2448 = vmatpush1.msra.mxu0 0.0
        %2449 = vmatprep.subr.mxu0 0.0
        %2450 = vmatpush1.msra.mxu0 0.0
        %2451 = vmatprep.subr.mxu0 0.0
        %2452 = vmatpush1.msra.mxu0 0.0
        %2453 = vmatprep.subr.mxu0 0.0
        %2454 = vmatpush1.msra.mxu0 0.0
        %2455 = vmatprep.subr.mxu0 0.0
        %2456 = vmatpush1.msra.mxu0 0.0
        %2457 = vmatprep.subr.mxu0 0.0
        %2458 = vmatpush1.msra.mxu0 0.0
        %2459 = vmatprep.subr.mxu0 0.0
        %2460 = vmatpush1.msra.mxu0 0.0
        %2461 = vmatprep.subr.mxu0 0.0
        %2462 = vmatpush1.msra.mxu0 0.0
        %2463 = vmatprep.subr.mxu0 0.0
        %2464 = vmatpush1.msra.mxu0 0.0
        %2465 = vmatprep.subr.mxu0 0.0
        %2466 = vmatpush1.msra.mxu0 0.0
        %2467 = vmatprep.subr.mxu0 0.0
        %2468 = vmatpush1.msra.mxu0 0.0
        %2469 = vmatprep.subr.mxu0 0.0
        %2470 = vmatpush1.msra.mxu0 0.0
        %2471 = vmatprep.subr.mxu0 0.0
        %2472 = vmatpush1.msra.mxu0 0.0
        %2473 = vmatprep.subr.mxu0 0.0
        %2474 = vmatpush1.msra.mxu0 0.0
        %2475 = vmatprep.subr.mxu0 0.0
        %2476 = vmatpush1.msra.mxu0 0.0
        %2477 = vmatprep.subr.mxu0 0.0
        %2478 = vmatpush1.msra.mxu0 0.0
        %2479 = vmatprep.subr.mxu0 0.0
        %2480 = vmatpush1.msra.mxu0 0.0
        %2481 = vmatprep.subr.mxu0 0.0
        %2482 = vmatpush1.msra.mxu0 0.0
        %2483 = vmatprep.mubr.f32.mxu0 0.0
        %2484 = vmatmul.mubr.f32.gmra.mrb[0].mxu0 %v2339
        %v2485 = vpop.f32.mrb[0].mxu0
        %v2486 = vadd.f32 %v2335, %v2485
        %v2487 = vpop.f32.mrb[0].mxu0
        %2488 = vmatprep.mubr.f32.mxu0 0.0
        %2489 = vmatmul.mubr.f32.gmra.mrb[0].mxu0 %v2342
        %v2490 = vpop.f32.mrb[0].mxu0
        %v2491 = vadd.f32 %v2336, %v2490
        %v2492 = vpop.f32.mrb[0].mxu0
        %2493 = vdwg.mxu0
        %2494 = vst [vmem:[%s652] sm:$0xff] %v2411
        %2495 = vst [vmem:[%s652 + $0x8] sm:$0xff] %v2416
        %2496 = vst [vmem:[%s652 + $0x10] sm:$0xff] %v2486
        %2497 = vst [vmem:[%s652 + $0x18] sm:$0xff] %v2491
        %s2498 = sand.u32 %s386, 1
        %s2499 = scalar_lea.sflag [#allocation4], %s2498
        %s2500 = sand.u32 %s386, 1
        %s2501 = smul.addr %s2500, 32
        %s2502 = scalar_lea.vmem [#allocation17], %s2501
        // Predicated region
        $region128: #{tpu_custom_call.1} parent=83 // pred_check
          %p2503 = pneg %p396
        $region129: #{tpu_custom_call.1} parent=83 // pred_check_branch
          %2505 = sbr.rel (%p2503) target = $region131
        $region130: #{tpu_custom_call.1} parent=83 // pred_region
          %s2506 = smul.u32 2, %s37
          %s2508 = ssub.s32 512, 512
          %2509 = vsyncadd %s2499, %s2508
          %s2510 = smul.addr %s2506, 2
          %s2511 = smul.addr %s2510, 128
          %s2512 = scalar_lea.hbm %s16, %s2511
          %s2513 = sshll.u32 %s2502, 4
          %s2514 = int_to_ptr.vmem [resolvable:$true] %s2513
          %2519 = dma.vmem_to_hbm [thread:$0]  %s2514, 512, %s2512, %s2499, 128, 128, 8
        $region131: #{tpu_custom_call.1} parent=83 // pred_fallthru
          _
      $region84: #{tpu_custom_call.1} parent=5 // pred_fallthru
        _
      %p2520 = scmp.le.s32.totalorder 2, %s32
      // Predicated region
      $region132: #{tpu_custom_call.1} parent=5 // pred_check
        %p2521 = pneg %p2520
      $region133: #{tpu_custom_call.1} parent=5 // pred_check_branch
        %2523 = sbr.rel (%p2521) target = $region135
      $region134: #{tpu_custom_call.1} parent=5 // pred_region
        %s2524 = ssub.s32 %s32, 2
        // Predicated region
        $region136: #{tpu_custom_call.1} parent=134 // pred_check
          %p2525 = pneg %p402
        $region137: #{tpu_custom_call.1} parent=134 // pred_check_branch
          %2527 = sbr.rel (%p2525) target = $region139
        $region138: #{tpu_custom_call.1} parent=134 // pred_region
          %s2528 = sand.u32 %s387, 1
          %s2529 = scalar_lea.sflag [#allocation4], %s2528
          %s2530 = sand.u32 %s387, 1
          %s2531 = smul.addr %s2530, 32
          %s2532 = scalar_lea.vmem [#allocation17], %s2531
          %2533 = dma.done %s2529, 512
        $region139: #{tpu_custom_call.1} parent=134 // pred_fallthru
          _
      $region135: #{tpu_custom_call.1} parent=5 // pred_fallthru
        _
    $region6: #{tpu_custom_call.1} parent=1 // loop_footer
      %s36 = sadd.s32 1, %s32
    $region7: #{tpu_custom_call.1} parent=1 // loop_footer_branch
      %31 = sbr.rel target = $region3
    $region8: #{tpu_custom_call.1} parent=1 // loop_exit
      _
    %2534 = vsyncpa [#allocation3], 1
    %s2535 = scalar_lea.sflag [#allocation3], 1
    %2536 = vsyncpa %s2535, 1
    %2537 = vsyncpa [#allocation6], 1
    %2538 = vsyncpa [#allocation9], 1
    %2539 = vsyncpa [#allocation12], 1
    %2540 = vsyncpa [#allocation15], 1
    %2541 = vsyncpa [#allocation4], 1
    %s2542 = scalar_lea.sflag [#allocation4], 1
    %2543 = vsyncpa %s2542, 1

</llo_original>
